<compile_context>
chip_gen: v7x
topology: tpu7x:2x2x1
jax: 0.10.0
libtpu: 0.0.40
codegen_flags: <defaults>
</compile_context>

<pallas_src>
import functools

import jax
import jax.numpy as jnp
from jax.experimental import pallas as pl
from jax.experimental.pallas import tpu as pltpu


_PARAM_NAMES = ("w1", "b1", "w2", "b2", "w3", "b3",
                "w4", "b4", "w5", "b5", "w6", "b6")


def _round_up(x, m):
    return ((x + m - 1) // m) * m


def _cdiv(a, b):
    return (a + b - 1) // b


@functools.lru_cache(maxsize=1)
def _single_buffer_supported():
    """Feature-detect pl.Buffered(1) once (single-buffered constant-index blocks)."""
    if not hasattr(pl, "Buffered"):
        return False
    try:
        def _probe(a_ref, o_ref):
            o_ref[...] = a_ref[...] + 1.0

        f = pl.pallas_call(
            _probe,
            out_shape=jax.ShapeDtypeStruct((16, 128), jnp.float32),
            grid=(2,),
            in_specs=[pl.BlockSpec((8, 128), lambda i: (0, 0),
                                   pipeline_mode=pl.Buffered(1))],
            out_specs=pl.BlockSpec((8, 128), lambda i: (i, 0)),
        )
        jax.block_until_ready(f(jnp.zeros((8, 128), jnp.float32)))
        return True
    except Exception:  # build does not support single-buffered blocks
        return False


def _ae_kernel(x_ref,
               w1, b1, w2, b2, w3, b3,      # encoder params
               w4, b4, w5, b5, w6, b6,      # decoder params
               lat_ref, rec_ref):
    def dense(h, w_ref, b_ref, relu):
        w = w_ref[...]
        # Keep activation math in f32; only feed the MXU in the weight dtype.
        lhs = h if w.dtype == jnp.float32 else h.astype(w.dtype)
        # TODO(synk): fp8 weight path (apply per-tensor scale to the f32 acc here).
        y = jnp.dot(lhs, w, preferred_element_type=jnp.float32)
        y = y + b_ref[...].astype(jnp.float32)
        return jnp.maximum(y, 0.0) if relu else y

    x = x_ref[...].astype(jnp.float32)

    # ---- encoder ----
    h = dense(x, w1, b1, True)
    h = dense(h, w2, b2, True)
    z = dense(h, w3, b3, False)
    lat_ref[...] = z.astype(lat_ref.dtype)

    # ---- decoder ----
    h = dense(z, w4, b4, True)
    h = dense(h, w5, b5, True)
    r = dense(h, w6, b6, False)
    rec_ref[...] = r.astype(rec_ref.dtype)


def anime_autoencoder_forward(x, params, *, block_b=None):
    """x: [B, input_dim] f32.  params: dict of (w, b) per layer, w is [in, out].

    Returns (latent_space [B, latent_dim], reconstructed [B, input_dim]),
    matching AnimeAutoencoder.forward.
    """
    B, input_dim = x.shape
    latent_dim = int(params["w3"].shape[1])
    w_dtype = jnp.dtype(params["w1"].dtype)

    # Sublane packing of the MXU-input dtype: f32 -> 8, bf16 -> 16, 8-bit -> 32.
    pack = {4: 8, 2: 16, 1: 32}[w_dtype.itemsize]

    # Batch tile: big tiles amortize per-step overhead (cap 512 for v5e roofline);
    # for large B keep an even number of "parallel" steps so v7x's 2 TCs split evenly.
    cap = 512
    if block_b is None:
        steps = _cdiv(B, cap)
        if steps > 1 and steps % 2 == 1:
            steps += 1
        block_b = min(_round_up(_cdiv(B, steps), pack), _round_up(cap, pack))
    block_b = _round_up(max(int(block_b), pack), pack)

    B_pad = _round_up(B, block_b)
    if B_pad != B:
        x = jnp.pad(x, ((0, B_pad - B), (0, 0)))
    grid = (B_pad // block_b,)

    # Lane-dense latent output: zero-pad w3/b3 columns and w4 rows up to 128 lanes
    # (exact semantics: padded latent columns are identically zero).
    lat_pad = max(_round_up(latent_dim, 128), 128)
    if lat_pad != latent_dim:
        pc = lat_pad - latent_dim
        params = dict(params)
        params["w3"] = jnp.pad(params["w3"], ((0, 0), (0, pc)))
        params["b3"] = jnp.pad(params["b3"], ((0, 0), (0, pc)))
        params["w4"] = jnp.pad(params["w4"], ((0, pc), (0, 0)))

    flat_params = [params[name] for name in _PARAM_NAMES]
    single_buffer = _single_buffer_supported()

    def param_spec(shape):
        # Whole tensor VMEM-resident, constant block index; single-buffered when
        # supported (double-buffering a constant block is pure VMEM waste).
        kwargs = {"pipeline_mode": pl.Buffered(1)} if single_buffer else {}
        return pl.BlockSpec(shape, lambda i, _n=len(shape): (0,) * _n, **kwargs)

    in_specs = [pl.BlockSpec((block_b, input_dim), lambda i: (i, 0))]
    in_specs += [param_spec(p.shape) for p in flat_params]

    out_shape = (
        jax.ShapeDtypeStruct((B_pad, lat_pad), x.dtype),
        jax.ShapeDtypeStruct((B_pad, input_dim), x.dtype),
    )
    out_specs = (
        pl.BlockSpec((block_b, lat_pad), lambda i: (i, 0)),
        pl.BlockSpec((block_b, input_dim), lambda i: (i, 0)),
    )

    # Scheduler hint + VMEM budget derived from the ACTUAL shapes/dtypes.
    weights = [params["w%d" % i] for i in range(1, 7)]
    flops = 2 * B_pad * sum(int(w.shape[0]) * int(w.shape[1]) for w in weights)
    param_bytes = sum(int(p.size) * p.dtype.itemsize for p in flat_params)
    io_bytes = (int(x.size) + B_pad * (lat_pad + input_dim)) * x.dtype.itemsize
    cost = pl.CostEstimate(flops=flops, transcendentals=0,
                           bytes_accessed=param_bytes + io_bytes)

    widths = [input_dim] + [int(w.shape[1]) for w in weights]
    act_bytes = block_b * sum(widths) * 4                       # f32 working set
    io_block_bytes = 2 * block_b * (input_dim + lat_pad + input_dim) * x.dtype.itemsize
    need = ((1 if single_buffer else 2) * param_bytes
            + io_block_bytes + 2 * act_bytes + (2 << 20))
    vmem_limit = int(min(max(need, 16 << 20), 64 << 20))

    latent, recon = pl.pallas_call(
        _ae_kernel,
        out_shape=out_shape,
        grid_spec=pltpu.PrefetchScalarGridSpec(
            num_scalar_prefetch=0,
            grid=grid,
            in_specs=in_specs,
            out_specs=out_specs,
        ),
        compiler_params=pltpu.CompilerParams(
            dimension_semantics=("parallel",),
            vmem_limit_bytes=vmem_limit),
        cost_estimate=cost,
    )(x, *flat_params)

    # Drop batch padding and the lane-padding of the latent.
    return latent[:B, :latent_dim], recon[:B]


def init_params(key, input_dim, latent_dim=128, dtype=jnp.bfloat16):
    """Deterministic synthetic weights, stored [in, out].  bf16 by default on all
    generations (weight-DMA bound at small batch; MXU is bf16-native)."""
    dims = [
        ("1", input_dim, 512),
        ("2", 512, 256),
        ("3", 256, latent_dim),
        ("4", latent_dim, 256),
        ("5", 256, 512),
        ("6", 512, input_dim),
    ]
    params = {}
    for name, fan_in, fan_out in dims:
        key, kw, kb = jax.random.split(key, 3)
        bound = 1.0 / float(fan_in) ** 0.5
        params["w" + name] = jax.random.uniform(
            kw, (fan_in, fan_out), dtype, minval=-bound, maxval=bound)
        # biases kept 2D (1, out) so they live cleanly in a VMEM tile
        params["b" + name] = jax.random.uniform(
            kb, (1, fan_out), dtype, minval=-bound, maxval=bound)
    return params


def reference_forward(x, params):
    """Plain-JAX reference matching the kernel's precision recipe exactly
    (cast MXU inputs to the weight dtype, f32 accumulation, f32 bias/ReLU)."""
    def dense(h, w, b, relu):
        lhs = h if w.dtype == jnp.float32 else h.astype(w.dtype)
        y = jnp.dot(lhs, w, preferred_element_type=jnp.float32)
        y = y + b.astype(jnp.float32)
        return jnp.maximum(y, 0.0) if relu else y

    h = dense(x.astype(jnp.float32), params["w1"], params["b1"], True)
    h = dense(h, params["w2"], params["b2"], True)
    z = dense(h, params["w3"], params["b3"], False)
    h = dense(z, params["w4"], params["b4"], True)
    h = dense(h, params["w5"], params["b5"], True)
    r = dense(h, params["w6"], params["b6"], False)
    return z, r


if __name__ == "__main__":
    key = jax.random.PRNGKey(0)
    B, INPUT_DIM, LATENT_DIM = 16, 256, 128

    kx, kp = jax.random.split(key)
    x = jax.random.normal(kx, (B, INPUT_DIM), jnp.float32)
    params = init_params(kp, INPUT_DIM, LATENT_DIM, dtype=jnp.bfloat16)

    latent, recon = anime_autoencoder_forward(x, params)
    jax.block_until_ready((latent, recon))

    # sanity check against a precision-matched plain-JAX reference
    lat_ref, rec_ref = reference_forward(x, params)
    assert latent.shape == (B, LATENT_DIM)
    assert recon.shape == (B, INPUT_DIM)
    assert jnp.allclose(latent, lat_ref, atol=1e-2, rtol=1e-2)
    assert jnp.allclose(recon, rec_ref, atol=1e-2, rtol=1e-2)

    print("KERNEL_OK")
</pallas_src>

<mosaic_0001>
module attributes {stable_mosaic.version = 11 : i64} {
  func.func @_probe(%arg0: i32, %arg1: memref<8x128xf32, #tpu.memory_space<vmem>>, %arg2: memref<8x128xf32, #tpu.memory_space<vmem>>) attributes {dimension_semantics = [#tpu.dimension_semantics<arbitrary>], iteration_bounds = array<i64: 2>, scalar_prefetch = 0 : i64, scratch_operands = 0 : i64, tpu.core_type = #tpu.core_type<tc>, window_params = [{pipeline_mode = #tpu.pipeline_mode<synchronous>, transform_indices = @transform_0, window_bounds = array<i64: 8, 128>}, {transform_indices = @transform_1, window_bounds = array<i64: 8, 128>}]} {
    %c0 = arith.constant 0 : index
    %c0_0 = arith.constant 0 : index
    %0 = vector.load %arg1[%c0, %c0_0] : memref<8x128xf32, #tpu.memory_space<vmem>>, vector<8x128xf32>
    %cst = arith.constant 1.000000e+00 : f32
    %1 = vector.broadcast %cst : f32 to vector<8x128xf32>
    %2 = arith.addf %0, %1 : vector<8x128xf32>
    %c0_1 = arith.constant 0 : index
    %c0_2 = arith.constant 0 : index
    %3 = vector.load %arg2[%c0_1, %c0_2] : memref<8x128xf32, #tpu.memory_space<vmem>>, vector<8x128xf32>
    tpu.vector_store %arg2[%c0_1, %c0_2], %2 {strides = array<i32>} : memref<8x128xf32, #tpu.memory_space<vmem>>, vector<8x128xf32>,
    return
  }
  func.func @transform_0(%arg0: i32) -> (i32, i32) {
    %c0_i32 = arith.constant 0 : i32
    %c0_i32_0 = arith.constant 0 : i32
    %c0_i32_1 = arith.constant 0 : i32
    return %c0_i32, %c0_i32_0 : i32, i32
  }
  func.func @transform_1(%arg0: i32) -> (i32, i32) {
    %c0_i32 = arith.constant 0 : i32
    %c0_i32_0 = arith.constant 0 : i32
    return %arg0, %c0_i32 : i32, i32
  }
}

module attributes {stable_mosaic.version = 11 : i64} {
  func.func @_ae_kernel(%arg0: i32, %arg1: memref<16x256xf32, #tpu.memory_space<vmem>>, %arg2: memref<256x512xbf16, #tpu.memory_space<vmem>>, %arg3: memref<1x512xbf16, #tpu.memory_space<vmem>>, %arg4: memref<512x256xbf16, #tpu.memory_space<vmem>>, %arg5: memref<1x256xbf16, #tpu.memory_space<vmem>>, %arg6: memref<256x128xbf16, #tpu.memory_space<vmem>>, %arg7: memref<1x128xbf16, #tpu.memory_space<vmem>>, %arg8: memref<128x256xbf16, #tpu.memory_space<vmem>>, %arg9: memref<1x256xbf16, #tpu.memory_space<vmem>>, %arg10: memref<256x512xbf16, #tpu.memory_space<vmem>>, %arg11: memref<1x512xbf16, #tpu.memory_space<vmem>>, %arg12: memref<512x256xbf16, #tpu.memory_space<vmem>>, %arg13: memref<1x256xbf16, #tpu.memory_space<vmem>>, %arg14: memref<16x128xf32, #tpu.memory_space<vmem>>, %arg15: memref<16x256xf32, #tpu.memory_space<vmem>>) attributes {dimension_semantics = [#tpu.dimension_semantics<parallel>], iteration_bounds = array<i64: 1>, scalar_prefetch = 0 : i64, scratch_operands = 0 : i64, tpu.core_type = #tpu.core_type<tc>, window_params = [{transform_indices = @transform_0, window_bounds = array<i64: 16, 256>}, {pipeline_mode = #tpu.pipeline_mode<synchronous>, transform_indices = @transform_1, window_bounds = array<i64: 256, 512>}, {pipeline_mode = #tpu.pipeline_mode<synchronous>, transform_indices = @transform_2, window_bounds = array<i64: 1, 512>}, {pipeline_mode = #tpu.pipeline_mode<synchronous>, transform_indices = @transform_3, window_bounds = array<i64: 512, 256>}, {pipeline_mode = #tpu.pipeline_mode<synchronous>, transform_indices = @transform_4, window_bounds = array<i64: 1, 256>}, {pipeline_mode = #tpu.pipeline_mode<synchronous>, transform_indices = @transform_5, window_bounds = array<i64: 256, 128>}, {pipeline_mode = #tpu.pipeline_mode<synchronous>, transform_indices = @transform_6, window_bounds = array<i64: 1, 128>}, {pipeline_mode = #tpu.pipeline_mode<synchronous>, transform_indices = @transform_7, window_bounds = array<i64: 128, 256>}, {pipeline_mode = #tpu.pipeline_mode<synchronous>, transform_indices = @transform_8, window_bounds = array<i64: 1, 256>}, {pipeline_mode = #tpu.pipeline_mode<synchronous>, transform_indices = @transform_9, window_bounds = array<i64: 256, 512>}, {pipeline_mode = #tpu.pipeline_mode<synchronous>, transform_indices = @transform_10, window_bounds = array<i64: 1, 512>}, {pipeline_mode = #tpu.pipeline_mode<synchronous>, transform_indices = @transform_11, window_bounds = array<i64: 512, 256>}, {pipeline_mode = #tpu.pipeline_mode<synchronous>, transform_indices = @transform_12, window_bounds = array<i64: 1, 256>}, {transform_indices = @transform_13, window_bounds = array<i64: 16, 128>}, {transform_indices = @transform_14, window_bounds = array<i64: 16, 256>}]} {
    %c0 = arith.constant 0 : index
    %c0_0 = arith.constant 0 : index
    %0 = vector.load %arg1[%c0, %c0_0] : memref<16x256xf32, #tpu.memory_space<vmem>>, vector<16x256xf32>
    %c0_1 = arith.constant 0 : index
    %c0_2 = arith.constant 0 : index
    %1 = vector.load %arg2[%c0_1, %c0_2] : memref<256x512xbf16, #tpu.memory_space<vmem>>, vector<256x512xbf16>
    %2 = arith.truncf %0 : vector<16x256xf32> to vector<16x256xbf16>
    %cst = arith.constant dense<0.000000e+00> : vector<16x512xf32>
    %3 = tpu.matmul %2, %1, %cst {dimension_numbers = #tpu.dot_dimension_numbers<[1], [0], [0], [1], [0, 0, 1, 1], [], []>} : vector<16x256xbf16>, vector<256x512xbf16>, vector<16x512xf32> -> vector<16x512xf32>
    %c0_3 = arith.constant 0 : index
    %c0_4 = arith.constant 0 : index
    %4 = vector.load %arg3[%c0_3, %c0_4] : memref<1x512xbf16, #tpu.memory_space<vmem>>, vector<1x512xbf16>
    %5 = arith.extf %4 : vector<1x512xbf16> to vector<1x512xf32>
    %6 = vector.broadcast %5 : vector<1x512xf32> to vector<16x512xf32>
    %7 = arith.addf %3, %6 : vector<16x512xf32>
    %cst_5 = arith.constant 0.000000e+00 : f32
    %8 = vector.broadcast %cst_5 : f32 to vector<16x512xf32>
    %9 = arith.maximumf %7, %8 : vector<16x512xf32>
    %c0_6 = arith.constant 0 : index
    %c0_7 = arith.constant 0 : index
    %10 = vector.load %arg4[%c0_6, %c0_7] : memref<512x256xbf16, #tpu.memory_space<vmem>>, vector<512x256xbf16>
    %11 = arith.truncf %9 : vector<16x512xf32> to vector<16x512xbf16>
    %cst_8 = arith.constant dense<0.000000e+00> : vector<16x256xf32>
    %12 = tpu.matmul %11, %10, %cst_8 {dimension_numbers = #tpu.dot_dimension_numbers<[1], [0], [0], [1], [0, 0, 1, 1], [], []>} : vector<16x512xbf16>, vector<512x256xbf16>, vector<16x256xf32> -> vector<16x256xf32>
    %c0_9 = arith.constant 0 : index
    %c0_10 = arith.constant 0 : index
    %13 = vector.load %arg5[%c0_9, %c0_10] : memref<1x256xbf16, #tpu.memory_space<vmem>>, vector<1x256xbf16>
    %14 = arith.extf %13 : vector<1x256xbf16> to vector<1x256xf32>
    %15 = vector.broadcast %14 : vector<1x256xf32> to vector<16x256xf32>
    %16 = arith.addf %12, %15 : vector<16x256xf32>
    %cst_11 = arith.constant 0.000000e+00 : f32
    %17 = vector.broadcast %cst_11 : f32 to vector<16x256xf32>
    %18 = arith.maximumf %16, %17 : vector<16x256xf32>
    %c0_12 = arith.constant 0 : index
    %c0_13 = arith.constant 0 : index
    %19 = vector.load %arg6[%c0_12, %c0_13] : memref<256x128xbf16, #tpu.memory_space<vmem>>, vector<256x128xbf16>
    %20 = arith.truncf %18 : vector<16x256xf32> to vector<16x256xbf16>
    %cst_14 = arith.constant dense<0.000000e+00> : vector<16x128xf32>
    %21 = tpu.matmul %20, %19, %cst_14 {dimension_numbers = #tpu.dot_dimension_numbers<[1], [0], [0], [1], [0, 0, 1, 1], [], []>} : vector<16x256xbf16>, vector<256x128xbf16>, vector<16x128xf32> -> vector<16x128xf32>
    %c0_15 = arith.constant 0 : index
    %c0_16 = arith.constant 0 : index
    %22 = vector.load %arg7[%c0_15, %c0_16] : memref<1x128xbf16, #tpu.memory_space<vmem>>, vector<1x128xbf16>
    %23 = arith.extf %22 : vector<1x128xbf16> to vector<1x128xf32>
    %24 = vector.broadcast %23 : vector<1x128xf32> to vector<16x128xf32>
    %25 = arith.addf %21, %24 : vector<16x128xf32>
    %c0_17 = arith.constant 0 : index
    %c0_18 = arith.constant 0 : index
    %26 = vector.load %arg14[%c0_17, %c0_18] : memref<16x128xf32, #tpu.memory_space<vmem>>, vector<16x128xf32>
    tpu.vector_store %arg14[%c0_17, %c0_18], %25 {strides = array<i32>} : memref<16x128xf32, #tpu.memory_space<vmem>>, vector<16x128xf32>,
    %c0_19 = arith.constant 0 : index
    %c0_20 = arith.constant 0 : index
    %27 = vector.load %arg8[%c0_19, %c0_20] : memref<128x256xbf16, #tpu.memory_space<vmem>>, vector<128x256xbf16>
    %28 = arith.truncf %25 : vector<16x128xf32> to vector<16x128xbf16>
    %cst_21 = arith.constant dense<0.000000e+00> : vector<16x256xf32>
    %29 = tpu.matmul %28, %27, %cst_21 {dimension_numbers = #tpu.dot_dimension_numbers<[1], [0], [0], [1], [0, 0, 1, 1], [], []>} : vector<16x128xbf16>, vector<128x256xbf16>, vector<16x256xf32> -> vector<16x256xf32>
    %c0_22 = arith.constant 0 : index
    %c0_23 = arith.constant 0 : index
    %30 = vector.load %arg9[%c0_22, %c0_23] : memref<1x256xbf16, #tpu.memory_space<vmem>>, vector<1x256xbf16>
    %31 = arith.extf %30 : vector<1x256xbf16> to vector<1x256xf32>
    %32 = vector.broadcast %31 : vector<1x256xf32> to vector<16x256xf32>
    %33 = arith.addf %29, %32 : vector<16x256xf32>
    %cst_24 = arith.constant 0.000000e+00 : f32
    %34 = vector.broadcast %cst_24 : f32 to vector<16x256xf32>
    %35 = arith.maximumf %33, %34 : vector<16x256xf32>
    %c0_25 = arith.constant 0 : index
    %c0_26 = arith.constant 0 : index
    %36 = vector.load %arg10[%c0_25, %c0_26] : memref<256x512xbf16, #tpu.memory_space<vmem>>, vector<256x512xbf16>
    %37 = arith.truncf %35 : vector<16x256xf32> to vector<16x256xbf16>
    %cst_27 = arith.constant dense<0.000000e+00> : vector<16x512xf32>
    %38 = tpu.matmul %37, %36, %cst_27 {dimension_numbers = #tpu.dot_dimension_numbers<[1], [0], [0], [1], [0, 0, 1, 1], [], []>} : vector<16x256xbf16>, vector<256x512xbf16>, vector<16x512xf32> -> vector<16x512xf32>
    %c0_28 = arith.constant 0 : index
    %c0_29 = arith.constant 0 : index
    %39 = vector.load %arg11[%c0_28, %c0_29] : memref<1x512xbf16, #tpu.memory_space<vmem>>, vector<1x512xbf16>
    %40 = arith.extf %39 : vector<1x512xbf16> to vector<1x512xf32>
    %41 = vector.broadcast %40 : vector<1x512xf32> to vector<16x512xf32>
    %42 = arith.addf %38, %41 : vector<16x512xf32>
    %cst_30 = arith.constant 0.000000e+00 : f32
    %43 = vector.broadcast %cst_30 : f32 to vector<16x512xf32>
    %44 = arith.maximumf %42, %43 : vector<16x512xf32>
    %c0_31 = arith.constant 0 : index
    %c0_32 = arith.constant 0 : index
    %45 = vector.load %arg12[%c0_31, %c0_32] : memref<512x256xbf16, #tpu.memory_space<vmem>>, vector<512x256xbf16>
    %46 = arith.truncf %44 : vector<16x512xf32> to vector<16x512xbf16>
    %cst_33 = arith.constant dense<0.000000e+00> : vector<16x256xf32>
    %47 = tpu.matmul %46, %45, %cst_33 {dimension_numbers = #tpu.dot_dimension_numbers<[1], [0], [0], [1], [0, 0, 1, 1], [], []>} : vector<16x512xbf16>, vector<512x256xbf16>, vector<16x256xf32> -> vector<16x256xf32>
    %c0_34 = arith.constant 0 : index
    %c0_35 = arith.constant 0 : index
    %48 = vector.load %arg13[%c0_34, %c0_35] : memref<1x256xbf16, #tpu.memory_space<vmem>>, vector<1x256xbf16>
    %49 = arith.extf %48 : vector<1x256xbf16> to vector<1x256xf32>
    %50 = vector.broadcast %49 : vector<1x256xf32> to vector<16x256xf32>
    %51 = arith.addf %47, %50 : vector<16x256xf32>
    %c0_36 = arith.constant 0 : index
    %c0_37 = arith.constant 0 : index
    %52 = vector.load %arg15[%c0_36, %c0_37] : memref<16x256xf32, #tpu.memory_space<vmem>>, vector<16x256xf32>
    tpu.vector_store %arg15[%c0_36, %c0_37], %51 {strides = array<i32>} : memref<16x256xf32, #tpu.memory_space<vmem>>, vector<16x256xf32>,
    return
  }
  func.func @transform_0(%arg0: i32) -> (i32, i32) {
    %c0_i32 = arith.constant 0 : i32
    %c0_i32_0 = arith.constant 0 : i32
    return %arg0, %c0_i32 : i32, i32
  }
  func.func @transform_1(%arg0: i32) -> (i32, i32) {
    %c0_i32 = arith.constant 0 : i32
    %c0_i32_0 = arith.constant 0 : i32
    %c0_i32_1 = arith.constant 0 : i32
    return %c0_i32, %c0_i32_0 : i32, i32
  }
  func.func @transform_2(%arg0: i32) -> (i32, i32) {
    %c0_i32 = arith.constant 0 : i32
    %c0_i32_0 = arith.constant 0 : i32
    %c0_i32_1 = arith.constant 0 : i32
    return %c0_i32, %c0_i32_0 : i32, i32
  }
  func.func @transform_3(%arg0: i32) -> (i32, i32) {
    %c0_i32 = arith.constant 0 : i32
    %c0_i32_0 = arith.constant 0 : i32
    %c0_i32_1 = arith.constant 0 : i32
    return %c0_i32, %c0_i32_0 : i32, i32
  }
  func.func @transform_4(%arg0: i32) -> (i32, i32) {
    %c0_i32 = arith.constant 0 : i32
    %c0_i32_0 = arith.constant 0 : i32
    %c0_i32_1 = arith.constant 0 : i32
    return %c0_i32, %c0_i32_0 : i32, i32
  }
  func.func @transform_5(%arg0: i32) -> (i32, i32) {
    %c0_i32 = arith.constant 0 : i32
    %c0_i32_0 = arith.constant 0 : i32
    %c0_i32_1 = arith.constant 0 : i32
    return %c0_i32, %c0_i32_0 : i32, i32
  }
  func.func @transform_6(%arg0: i32) -> (i32, i32) {
    %c0_i32 = arith.constant 0 : i32
    %c0_i32_0 = arith.constant 0 : i32
    %c0_i32_1 = arith.constant 0 : i32
    return %c0_i32, %c0_i32_0 : i32, i32
  }
  func.func @transform_7(%arg0: i32) -> (i32, i32) {
    %c0_i32 = arith.constant 0 : i32
    %c0_i32_0 = arith.constant 0 : i32
    %c0_i32_1 = arith.constant 0 : i32
    return %c0_i32, %c0_i32_0 : i32, i32
  }
  func.func @transform_8(%arg0: i32) -> (i32, i32) {
    %c0_i32 = arith.constant 0 : i32
    %c0_i32_0 = arith.constant 0 : i32
    %c0_i32_1 = arith.constant 0 : i32
    return %c0_i32, %c0_i32_0 : i32, i32
  }
  func.func @transform_9(%arg0: i32) -> (i32, i32) {
    %c0_i32 = arith.constant 0 : i32
    %c0_i32_0 = arith.constant 0 : i32
    %c0_i32_1 = arith.constant 0 : i32
    return %c0_i32, %c0_i32_0 : i32, i32
  }
  func.func @transform_10(%arg0: i32) -> (i32, i32) {
    %c0_i32 = arith.constant 0 : i32
    %c0_i32_0 = arith.constant 0 : i32
    %c0_i32_1 = arith.constant 0 : i32
    return %c0_i32, %c0_i32_0 : i32, i32
  }
  func.func @transform_11(%arg0: i32) -> (i32, i32) {
    %c0_i32 = arith.constant 0 : i32
    %c0_i32_0 = arith.constant 0 : i32
    %c0_i32_1 = arith.constant 0 : i32
    return %c0_i32, %c0_i32_0 : i32, i32
  }
  func.func @transform_12(%arg0: i32) -> (i32, i32) {
    %c0_i32 = arith.constant 0 : i32
    %c0_i32_0 = arith.constant 0 : i32
    %c0_i32_1 = arith.constant 0 : i32
    return %c0_i32, %c0_i32_0 : i32, i32
  }
  func.func @transform_13(%arg0: i32) -> (i32, i32) {
    %c0_i32 = arith.constant 0 : i32
    %c0_i32_0 = arith.constant 0 : i32
    return %arg0, %c0_i32 : i32, i32
  }
  func.func @transform_14(%arg0: i32) -> (i32, i32) {
    %c0_i32 = arith.constant 0 : i32
    %c0_i32_0 = arith.constant 0 : i32
    return %arg0, %c0_i32 : i32, i32
  }
}

</mosaic_0001>

<llo_original>
// kernel: tpu_custom_call.1
$region0: #{tpu_custom_call.1}
  #allocation0 [shape = 'u32[]', space=smem, size = 0x4, offset = 0x4, fixed_abs, tag = 'smem constant byte address 0x4 - core index']
  #allocation1 [shape = 'u32[144,128]{1,0:T(1,128)}', space=vmem, size = 0x12000, scoped, tag = 'internal scratch']
  %s0 = inlined_call_operand.hbm [shape: f32[8,128], index: 0, kind: input, shape index: {}]
  %s1 = inlined_call_operand.hbm [shape: f32[16,128], index: 1, kind: output, shape index: {}]
  %s2 = sld [smem:[#allocation0]]
  $region41: #{tpu_custom_call.1} parent=0
    _
  %s4 = ssub.s32 1, %s2
  %s5 = scalar_select 0, %s4, %s2
  $region1: #{tpu_custom_call.1} parent=0
    #allocation2 [shape = 'u8[4096]{0}', space=vmem, size = 0x1000, scoped, tag = 'input window, operand 0, single buffered']
    #allocation3 [shape = 's32[2]{0}', space=sflag, size = 0x8, scoped, tag = 'scoped memory for tpu_custom_call.1']
    #allocation4 [shape = 's32[2]{0}', space=sflag, size = 0x8, scoped, tag = 'scoped memory for tpu_custom_call.1']
    #allocation5 [shape = 'u8[8192]{0}', space=vmem, size = 0x2000, scoped, tag = 'output window, operand 0']
    %6 = vsyncpa [#allocation3], 0
    %7 = vsyncpa [#allocation4], 0
    %s8 = scalar_lea.sflag [#allocation4], 1
    %9 = vsyncpa %s8, 0
    loop: start=0, step=1, limit=4
    $region2: #{tpu_custom_call.1} parent=1 // loop_pre_header
      _
    $region3: #{tpu_custom_call.1} parent=1 // loop_header
      %s11 = sphi 0, %s15
      %p12 = scmp.ge.s32.totalorder %s11, 4
      %s19 = sphi 0, %s19
      %s21 = sphi 0, %s19
      %s22 = sphi 0, %s21
      %s36 = sphi 0, %s22
      %s42 = sphi 0, %s44
      %s45 = sphi 0, %s42
      %s46 = sphi 0, %s45
      %s62 = sphi 0, %s46
    $region4: #{tpu_custom_call.1} parent=1 // loop_header_branch
      %14 = sbr.rel (%p12) target = $region8
    $region5: #{tpu_custom_call.1} parent=1 // loop_body
      %s16 = ssub.s32 %s11, 1
      %s17 = ssub.s32 %s11, 2
      %s18 = sadd.s32 %s11, 1
      %s20 = sadd.s32 %s19, 1
      %p23 = scmp.eq.s32.totalorder %s11, 1
      %p24 = scmp.ne.s32.totalorder %s19, %s21
      %p25 = scmp.eq.s32.totalorder %s11, 0
      %p26 = por %p24, %p25
      %p27 = scmp.ne.s32.totalorder %s19, %s21
      %p28 = scmp.eq.s32.totalorder %s16, 1
      %p29 = por %p27, %p28
      %p30 = scmp.ne.s32.totalorder %s21, %s22
      %p31 = scmp.eq.s32.totalorder %s16, 0
      %p32 = por %p30, %p31
      %p33 = scmp.ne.s32.totalorder %s21, %s22
      %p34 = scmp.eq.s32.totalorder %s17, 1
      %p35 = por %p33, %p34
      %p37 = scmp.ne.s32.totalorder %s22, %s36
      %p38 = scmp.eq.s32.totalorder %s17, 0
      %p39 = por %p37, %p38
      %s40 = ssub.s32 %s11, %s18
      %p41 = scmp.eq.s32.totalorder %s40, 0
      %s43 = sadd.s32 %s42, 1
      %s44 = scalar_select %p41, %s42, %s43
      %p47 = pneg %p41
      %p48 = scmp.eq.s32.totalorder %s11, 1
      %p49 = por %p47, %p48
      %p50 = scmp.ne.s32.totalorder %s42, %s45
      %p51 = scmp.eq.s32.totalorder %s11, 0
      %p52 = por %p50, %p51
      %p53 = scmp.ne.s32.totalorder %s42, %s45
      %p54 = scmp.eq.s32.totalorder %s16, 1
      %p55 = por %p53, %p54
      %p56 = scmp.ne.s32.totalorder %s45, %s46
      %p57 = scmp.eq.s32.totalorder %s16, 0
      %p58 = por %p56, %p57
      %p59 = scmp.ne.s32.totalorder %s45, %s46
      %p60 = scmp.eq.s32.totalorder %s17, 1
      %p61 = por %p59, %p60
      %p63 = scmp.ne.s32.totalorder %s46, %s62
      %p64 = scmp.eq.s32.totalorder %s17, 0
      %p65 = por %p63, %p64
      %p66 = scmp.le.s32.totalorder 1, %s11
      %p67 = scmp.lt.s32.totalorder %s11, 3
      %p68 = pnand %p66, %p67
      %p69 = pneg %p68
      // Predicated region
      $region9: #{tpu_custom_call.1} parent=5 // pred_check
        _
      $region10: #{tpu_custom_call.1} parent=5 // pred_check_branch
        %71 = sbr.rel (%p68) target = $region12
      $region11: #{tpu_custom_call.1} parent=5 // pred_region
        %s72 = ssub.s32 %s11, 1
        // Predicated region
        $region13: #{tpu_custom_call.1} parent=11 // pred_check
          %p73 = pneg %p32
        $region14: #{tpu_custom_call.1} parent=11 // pred_check_branch
          %75 = sbr.rel (%p73) target = $region16
        $region15: #{tpu_custom_call.1} parent=11 // pred_region
          %s77 = ssub.s32 128, 128
          %78 = vsyncadd [#allocation3], %s77
          %s80 = sshll.u32 [#allocation2], 4
          %s81 = int_to_ptr.vmem [resolvable:$true] %s80
          %83 = dma.hbm_to_vmem [thread:$0]  %s0, 128, %s81, [#allocation3]
        $region16: #{tpu_custom_call.1} parent=11 // pred_fallthru
          _
      $region12: #{tpu_custom_call.1} parent=5 // pred_fallthru
        _
      %p84 = scmp.lt.s32.totalorder %s11, 2
      // Predicated region
      $region17: #{tpu_custom_call.1} parent=5 // pred_check
        %p85 = pneg %p84
      $region18: #{tpu_custom_call.1} parent=5 // pred_check_branch
        %87 = sbr.rel (%p85) target = $region20
      $region19: #{tpu_custom_call.1} parent=5 // pred_region
        _
      $region20: #{tpu_custom_call.1} parent=5 // pred_fallthru
        _
      %p88 = scmp.le.s32.totalorder 1, %s11
      %p89 = scmp.lt.s32.totalorder %s11, 3
      %p90 = pnand %p88, %p89
      %p91 = pneg %p90
      // Predicated region
      $region21: #{tpu_custom_call.1} parent=5 // pred_check
        _
      $region22: #{tpu_custom_call.1} parent=5 // pred_check_branch
        %93 = sbr.rel (%p90) target = $region24
      $region23: #{tpu_custom_call.1} parent=5 // pred_region
        %s94 = ssub.s32 %s11, 1
        // Predicated region
        $region25: #{tpu_custom_call.1} parent=23 // pred_check
          %p95 = pneg %p32
        $region26: #{tpu_custom_call.1} parent=23 // pred_check_branch
          %97 = sbr.rel (%p95) target = $region28
        $region27: #{tpu_custom_call.1} parent=23 // pred_region
          %98 = dma.done [#allocation3], 128
        $region28: #{tpu_custom_call.1} parent=23 // pred_fallthru
          _
        %p99 = pneg %p32
        %p100 = pneg %p29
        %p101 = pneg %p58
        %p102 = pneg %p55
        %s103 = sand.u32 %s45, 1
        %s104 = scalar_lea.sflag [#allocation4], %s103
        %s105 = sand.u32 %s45, 1
        %s106 = smul.addr %s105, 8
        %s107 = scalar_lea.vmem [#allocation5], %s106
        %v108 = vld [vmem:[#allocation2] sm:$0xff]
        %v109 = vadd.f32 %v108, 1.0
        %110 = vst [vmem:[%s107] sm:$0xff] %v109
        %s111 = sand.u32 %s45, 1
        %s112 = scalar_lea.sflag [#allocation4], %s111
        %s113 = sand.u32 %s45, 1
        %s114 = smul.addr %s113, 8
        %s115 = scalar_lea.vmem [#allocation5], %s114
        // Predicated region
        $region29: #{tpu_custom_call.1} parent=23 // pred_check
          %p116 = pneg %p55
        $region30: #{tpu_custom_call.1} parent=23 // pred_check_branch
          %118 = sbr.rel (%p116) target = $region32
        $region31: #{tpu_custom_call.1} parent=23 // pred_region
          %s120 = ssub.s32 128, 128
          %121 = vsyncadd %s112, %s120
          %s122 = smul.addr %s16, 128
          %s123 = scalar_lea.hbm %s1, %s122
          %s125 = sshll.u32 %s115, 4
          %s126 = int_to_ptr.vmem [resolvable:$true] %s125
          %128 = dma.vmem_to_hbm [thread:$0]  %s126, 128, %s123, %s112
        $region32: #{tpu_custom_call.1} parent=23 // pred_fallthru
          _
      $region24: #{tpu_custom_call.1} parent=5 // pred_fallthru
        _
      %p129 = scmp.le.s32.totalorder 2, %s11
      // Predicated region
      $region33: #{tpu_custom_call.1} parent=5 // pred_check
        %p130 = pneg %p129
      $region34: #{tpu_custom_call.1} parent=5 // pred_check_branch
        %132 = sbr.rel (%p130) target = $region36
      $region35: #{tpu_custom_call.1} parent=5 // pred_region
        %s133 = ssub.s32 %s11, 2
        // Predicated region
        $region37: #{tpu_custom_call.1} parent=35 // pred_check
          %p134 = pneg %p61
        $region38: #{tpu_custom_call.1} parent=35 // pred_check_branch
          %136 = sbr.rel (%p134) target = $region40
        $region39: #{tpu_custom_call.1} parent=35 // pred_region
          %s137 = sand.u32 %s46, 1
          %s138 = scalar_lea.sflag [#allocation4], %s137
          %s139 = sand.u32 %s46, 1
          %s140 = smul.addr %s139, 8
          %s141 = scalar_lea.vmem [#allocation5], %s140
          %142 = dma.done %s138, 128
        $region40: #{tpu_custom_call.1} parent=35 // pred_fallthru
          _
      $region36: #{tpu_custom_call.1} parent=5 // pred_fallthru
        _
    $region6: #{tpu_custom_call.1} parent=1 // loop_footer
      %s15 = sadd.s32 1, %s11
    $region7: #{tpu_custom_call.1} parent=1 // loop_footer_branch
      %10 = sbr.rel target = $region3
    $region8: #{tpu_custom_call.1} parent=1 // loop_exit
      _
    %143 = vsyncpa [#allocation3], 1
    %s144 = scalar_lea.sflag [#allocation3], 1
    %145 = vsyncpa %s144, 1
    %146 = vsyncpa [#allocation4], 1
    %s147 = scalar_lea.sflag [#allocation4], 1
    %148 = vsyncpa %s147, 1

// kernel: tpu_custom_call.1
$region0: #{tpu_custom_call.1}
  #allocation0 [shape = 'u32[]', space=smem, size = 0x4, offset = 0x4, fixed_abs, tag = 'smem constant byte address 0x4 - core index']
  #allocation1 [shape = 'u32[144,128]{1,0:T(1,128)}', space=vmem, size = 0x12000, scoped, tag = 'internal scratch']
  %s0 = inlined_call_operand.hbm [shape: f32[16,256], index: 0, kind: input, shape index: {}]
  %s1 = inlined_call_operand.hbm [shape: bf16[256,512], index: 1, kind: input, shape index: {}]
  %s2 = inlined_call_operand.vmem [shape: bf16[1,512], index: 2, kind: input, shape index: {}]
  %s3 = inlined_call_operand.hbm [shape: bf16[512,256], index: 3, kind: input, shape index: {}]
  %s4 = inlined_call_operand.vmem [shape: bf16[1,256], index: 4, kind: input, shape index: {}]
  %s5 = inlined_call_operand.hbm [shape: bf16[256,128], index: 5, kind: input, shape index: {}]
  %s6 = inlined_call_operand.vmem [shape: bf16[1,128], index: 6, kind: input, shape index: {}]
  %s7 = inlined_call_operand.hbm [shape: bf16[128,256], index: 7, kind: input, shape index: {}]
  %s8 = inlined_call_operand.vmem [shape: bf16[1,256], index: 8, kind: input, shape index: {}]
  %s9 = inlined_call_operand.hbm [shape: bf16[256,512], index: 9, kind: input, shape index: {}]
  %s10 = inlined_call_operand.vmem [shape: bf16[1,512], index: 10, kind: input, shape index: {}]
  %s11 = inlined_call_operand.hbm [shape: bf16[512,256], index: 11, kind: input, shape index: {}]
  %s12 = inlined_call_operand.vmem [shape: bf16[1,256], index: 12, kind: input, shape index: {}]
  %s13 = inlined_call_operand.hbm [shape: f32[16,128], index: 13, kind: output, shape index: {0}]
  %s14 = inlined_call_operand.hbm [shape: f32[16,256], index: 14, kind: output, shape index: {1}]
  %15 = xla_tuple %s13, %s14
  %s16 = sld [smem:[#allocation0]]
  $region98: #{tpu_custom_call.1} parent=0
    _
  %s18 = ssub.s32 1, %s16
  %s19 = scalar_select 0, %s18, %s16
  $region1: #{tpu_custom_call.1} parent=0
    #allocation2 [shape = 'u8[16384]{0}', space=vmem, size = 0x4000, scoped, tag = 'input window, operand 0, single buffered']
    #allocation3 [shape = 's32[1]{0}', space=sflag, size = 0x4, scoped, tag = 'scoped memory for tpu_custom_call.1']
    #allocation4 [shape = 's32[1]{0}', space=sflag, size = 0x4, scoped, tag = 'scoped memory for tpu_custom_call.1']
    #allocation5 [shape = 'u8[262144]{0}', space=vmem, size = 0x40000, scoped, tag = 'input window, operand 1, single buffered']
    #allocation6 [shape = 's32[1]{0}', space=sflag, size = 0x4, scoped, tag = 'scoped memory for tpu_custom_call.1']
    #allocation7 [shape = 'u8[262144]{0}', space=vmem, size = 0x40000, scoped, tag = 'input window, operand 3, single buffered']
    #allocation8 [shape = 'u8[65536]{0}', space=vmem, size = 0x10000, scoped, tag = 'input window, operand 5, single buffered']
    #allocation9 [shape = 's32[1]{0}', space=sflag, size = 0x4, scoped, tag = 'scoped memory for tpu_custom_call.1']
    #allocation10 [shape = 'u8[65536]{0}', space=vmem, size = 0x10000, scoped, tag = 'input window, operand 7, single buffered']
    #allocation11 [shape = 'u8[262144]{0}', space=vmem, size = 0x40000, scoped, tag = 'input window, operand 9, single buffered']
    #allocation12 [shape = 's32[1]{0}', space=sflag, size = 0x4, scoped, tag = 'scoped memory for tpu_custom_call.1']
    #allocation13 [shape = 'u8[262144]{0}', space=vmem, size = 0x40000, scoped, tag = 'input window, operand 11, single buffered']
    #allocation14 [shape = 'u8[8192]{0}', space=vmem, size = 0x2000, scoped, tag = 'output window, operand 0, single buffered']
    #allocation15 [shape = 'u8[16384]{0}', space=vmem, size = 0x4000, scoped, tag = 'output window, operand 1, single buffered']
    #allocation16 [shape = 's32[1]{0}', space=sflag, size = 0x4, scoped, tag = 'scoped memory for tpu_custom_call.1']
    %20 = vsyncpa [#allocation3], 0
    %21 = vsyncpa [#allocation6], 0
    %22 = vsyncpa [#allocation9], 0
    %23 = vsyncpa [#allocation12], 0
    %24 = vsyncpa [#allocation4], 0
    %25 = vsyncpa [#allocation16], 0
    // Predicated region
    $region2: #{tpu_custom_call.1} parent=1 // pred_check
      _
    $region3: #{tpu_custom_call.1} parent=1 // pred_check_branch
      %27 = sbr.rel (0) target = $region5
    $region4: #{tpu_custom_call.1} parent=1 // pred_region
      %s29 = ssub.s32 512, 512
      %30 = vsyncadd [#allocation3], %s29
      %s31 = sshll.u32 [#allocation2], 4
      %s32 = int_to_ptr.vmem [resolvable:$true] %s31
      %37 = dma.hbm_to_vmem [thread:$0]  %s0, 512, %s32, [#allocation3], 256, 256, 16
    $region5: #{tpu_custom_call.1} parent=1 // pred_fallthru
      _
    // Predicated region
    $region6: #{tpu_custom_call.1} parent=1 // pred_check
      _
    $region7: #{tpu_custom_call.1} parent=1 // pred_check_branch
      %39 = sbr.rel (0) target = $region9
    $region8: #{tpu_custom_call.1} parent=1 // pred_region
      %s41 = ssub.s32 8192, 8192
      %42 = vsyncadd [#allocation6], %s41
      %s43 = sshll.u32 [#allocation5], 4
      %s44 = int_to_ptr.vmem [resolvable:$true] %s43
      %49 = dma.hbm_to_vmem [thread:$0]  %s1, 8192, %s44, [#allocation6], 256, 256, 16
    $region9: #{tpu_custom_call.1} parent=1 // pred_fallthru
      _
    // Predicated region
    $region10: #{tpu_custom_call.1} parent=1 // pred_check
      _
    $region11: #{tpu_custom_call.1} parent=1 // pred_check_branch
      %51 = sbr.rel (0) target = $region13
    $region12: #{tpu_custom_call.1} parent=1 // pred_region
      _
    $region13: #{tpu_custom_call.1} parent=1 // pred_fallthru
      _
    // Predicated region
    $region14: #{tpu_custom_call.1} parent=1 // pred_check
      _
    $region15: #{tpu_custom_call.1} parent=1 // pred_check_branch
      %53 = sbr.rel (0) target = $region17
    $region16: #{tpu_custom_call.1} parent=1 // pred_region
      %s55 = ssub.s32 8192, 8192
      %56 = vsyncadd [#allocation6], %s55
      %s57 = sshll.u32 [#allocation7], 4
      %s58 = int_to_ptr.vmem [resolvable:$true] %s57
      %63 = dma.hbm_to_vmem [thread:$0]  %s3, 8192, %s58, [#allocation6], 128, 128, 8
    $region17: #{tpu_custom_call.1} parent=1 // pred_fallthru
      _
    // Predicated region
    $region18: #{tpu_custom_call.1} parent=1 // pred_check
      _
    $region19: #{tpu_custom_call.1} parent=1 // pred_check_branch
      %65 = sbr.rel (0) target = $region21
    $region20: #{tpu_custom_call.1} parent=1 // pred_region
      _
    $region21: #{tpu_custom_call.1} parent=1 // pred_fallthru
      _
    // Predicated region
    $region22: #{tpu_custom_call.1} parent=1 // pred_check
      _
    $region23: #{tpu_custom_call.1} parent=1 // pred_check_branch
      %67 = sbr.rel (0) target = $region25
    $region24: #{tpu_custom_call.1} parent=1 // pred_region
      %s69 = ssub.s32 2048, 2048
      %70 = vsyncadd [#allocation9], %s69
      %s71 = sshll.u32 [#allocation8], 4
      %s72 = int_to_ptr.vmem [resolvable:$true] %s71
      %77 = dma.hbm_to_vmem [thread:$0]  %s5, 2048, %s72, [#allocation9], 64, 64, 4
    $region25: #{tpu_custom_call.1} parent=1 // pred_fallthru
      _
    // Predicated region
    $region26: #{tpu_custom_call.1} parent=1 // pred_check
      _
    $region27: #{tpu_custom_call.1} parent=1 // pred_check_branch
      %79 = sbr.rel (0) target = $region29
    $region28: #{tpu_custom_call.1} parent=1 // pred_region
      _
    $region29: #{tpu_custom_call.1} parent=1 // pred_fallthru
      _
    // Predicated region
    $region30: #{tpu_custom_call.1} parent=1 // pred_check
      _
    $region31: #{tpu_custom_call.1} parent=1 // pred_check_branch
      %81 = sbr.rel (0) target = $region33
    $region32: #{tpu_custom_call.1} parent=1 // pred_region
      %s83 = ssub.s32 2048, 2048
      %84 = vsyncadd [#allocation9], %s83
      %s85 = sshll.u32 [#allocation10], 4
      %s86 = int_to_ptr.vmem [resolvable:$true] %s85
      %91 = dma.hbm_to_vmem [thread:$0]  %s7, 2048, %s86, [#allocation9], 128, 128, 8
    $region33: #{tpu_custom_call.1} parent=1 // pred_fallthru
      _
    // Predicated region
    $region34: #{tpu_custom_call.1} parent=1 // pred_check
      _
    $region35: #{tpu_custom_call.1} parent=1 // pred_check_branch
      %93 = sbr.rel (0) target = $region37
    $region36: #{tpu_custom_call.1} parent=1 // pred_region
      _
    $region37: #{tpu_custom_call.1} parent=1 // pred_fallthru
      _
    // Predicated region
    $region38: #{tpu_custom_call.1} parent=1 // pred_check
      _
    $region39: #{tpu_custom_call.1} parent=1 // pred_check_branch
      %95 = sbr.rel (0) target = $region41
    $region40: #{tpu_custom_call.1} parent=1 // pred_region
      %s97 = ssub.s32 8192, 8192
      %98 = vsyncadd [#allocation12], %s97
      %s99 = sshll.u32 [#allocation11], 4
      %s100 = int_to_ptr.vmem [resolvable:$true] %s99
      %105 = dma.hbm_to_vmem [thread:$0]  %s9, 8192, %s100, [#allocation12], 256, 256, 16
    $region41: #{tpu_custom_call.1} parent=1 // pred_fallthru
      _
    // Predicated region
    $region42: #{tpu_custom_call.1} parent=1 // pred_check
      _
    $region43: #{tpu_custom_call.1} parent=1 // pred_check_branch
      %107 = sbr.rel (0) target = $region45
    $region44: #{tpu_custom_call.1} parent=1 // pred_region
      _
    $region45: #{tpu_custom_call.1} parent=1 // pred_fallthru
      _
    // Predicated region
    $region46: #{tpu_custom_call.1} parent=1 // pred_check
      _
    $region47: #{tpu_custom_call.1} parent=1 // pred_check_branch
      %109 = sbr.rel (0) target = $region49
    $region48: #{tpu_custom_call.1} parent=1 // pred_region
      %s111 = ssub.s32 8192, 8192
      %112 = vsyncadd [#allocation12], %s111
      %s113 = sshll.u32 [#allocation13], 4
      %s114 = int_to_ptr.vmem [resolvable:$true] %s113
      %119 = dma.hbm_to_vmem [thread:$0]  %s11, 8192, %s114, [#allocation12], 128, 128, 8
    $region49: #{tpu_custom_call.1} parent=1 // pred_fallthru
      _
    // Predicated region
    $region50: #{tpu_custom_call.1} parent=1 // pred_check
      _
    $region51: #{tpu_custom_call.1} parent=1 // pred_check_branch
      %121 = sbr.rel (0) target = $region53
    $region52: #{tpu_custom_call.1} parent=1 // pred_region
      _
    $region53: #{tpu_custom_call.1} parent=1 // pred_fallthru
      _
    // Predicated region
    $region54: #{tpu_custom_call.1} parent=1 // pred_check
      _
    $region55: #{tpu_custom_call.1} parent=1 // pred_check_branch
      %123 = sbr.rel (0) target = $region57
    $region56: #{tpu_custom_call.1} parent=1 // pred_region
      %124 = dma.done [#allocation3], 512
    $region57: #{tpu_custom_call.1} parent=1 // pred_fallthru
      _
    // Predicated region
    $region58: #{tpu_custom_call.1} parent=1 // pred_check
      _
    $region59: #{tpu_custom_call.1} parent=1 // pred_check_branch
      %126 = sbr.rel (0) target = $region61
    $region60: #{tpu_custom_call.1} parent=1 // pred_region
      %127 = dma.done [#allocation6], 8192
    $region61: #{tpu_custom_call.1} parent=1 // pred_fallthru
      _
    // Predicated region
    $region62: #{tpu_custom_call.1} parent=1 // pred_check
      _
    $region63: #{tpu_custom_call.1} parent=1 // pred_check_branch
      %129 = sbr.rel (0) target = $region65
    $region64: #{tpu_custom_call.1} parent=1 // pred_region
      %130 = dma.done [#allocation6], 8192
    $region65: #{tpu_custom_call.1} parent=1 // pred_fallthru
      _
    // Predicated region
    $region66: #{tpu_custom_call.1} parent=1 // pred_check
      _
    $region67: #{tpu_custom_call.1} parent=1 // pred_check_branch
      %132 = sbr.rel (0) target = $region69
    $region68: #{tpu_custom_call.1} parent=1 // pred_region
      %133 = dma.done [#allocation9], 2048
    $region69: #{tpu_custom_call.1} parent=1 // pred_fallthru
      _
    // Predicated region
    $region70: #{tpu_custom_call.1} parent=1 // pred_check
      _
    $region71: #{tpu_custom_call.1} parent=1 // pred_check_branch
      %135 = sbr.rel (0) target = $region73
    $region72: #{tpu_custom_call.1} parent=1 // pred_region
      %136 = dma.done [#allocation9], 2048
    $region73: #{tpu_custom_call.1} parent=1 // pred_fallthru
      _
    // Predicated region
    $region74: #{tpu_custom_call.1} parent=1 // pred_check
      _
    $region75: #{tpu_custom_call.1} parent=1 // pred_check_branch
      %138 = sbr.rel (0) target = $region77
    $region76: #{tpu_custom_call.1} parent=1 // pred_region
      %139 = dma.done [#allocation12], 8192
    $region77: #{tpu_custom_call.1} parent=1 // pred_fallthru
      _
    // Predicated region
    $region78: #{tpu_custom_call.1} parent=1 // pred_check
      _
    $region79: #{tpu_custom_call.1} parent=1 // pred_check_branch
      %141 = sbr.rel (0) target = $region81
    $region80: #{tpu_custom_call.1} parent=1 // pred_region
      %142 = dma.done [#allocation12], 8192
    $region81: #{tpu_custom_call.1} parent=1 // pred_fallthru
      _
    %v144 = vld [vmem:[#allocation2] sm:$0xff]
    %v145 = vld [vmem:[#allocation2 + $0x8] sm:$0xff]
    %v146 = vld [vmem:[#allocation2 + $0x10] sm:$0xff]
    %v147 = vld [vmem:[#allocation2 + $0x18] sm:$0xff]
    %v148 = vld [vmem:[#allocation5] sm:$0xff]
    %v149 = vld [vmem:[#allocation5 + $0x8] sm:$0xff]
    %v150 = vld [vmem:[#allocation5 + $0x10] sm:$0xff]
    %v151 = vld [vmem:[#allocation5 + $0x18] sm:$0xff]
    %v152 = vld [vmem:[#allocation5 + $0x20] sm:$0xff]
    %v153 = vld [vmem:[#allocation5 + $0x28] sm:$0xff]
    %v154 = vld [vmem:[#allocation5 + $0x30] sm:$0xff]
    %v155 = vld [vmem:[#allocation5 + $0x38] sm:$0xff]
    %v156 = vld [vmem:[#allocation5 + $0x40] sm:$0xff]
    %v157 = vld [vmem:[#allocation5 + $0x48] sm:$0xff]
    %v158 = vld [vmem:[#allocation5 + $0x50] sm:$0xff]
    %v159 = vld [vmem:[#allocation5 + $0x58] sm:$0xff]
    %v160 = vld [vmem:[#allocation5 + $0x60] sm:$0xff]
    %v161 = vld [vmem:[#allocation5 + $0x68] sm:$0xff]
    %v162 = vld [vmem:[#allocation5 + $0x70] sm:$0xff]
    %v163 = vld [vmem:[#allocation5 + $0x78] sm:$0xff]
    %v164 = vld [vmem:[#allocation5 + $0x80] sm:$0xff]
    %v165 = vld [vmem:[#allocation5 + $0x88] sm:$0xff]
    %v166 = vld [vmem:[#allocation5 + $0x90] sm:$0xff]
    %v167 = vld [vmem:[#allocation5 + $0x98] sm:$0xff]
    %v168 = vld [vmem:[#allocation5 + $0xa0] sm:$0xff]
    %v169 = vld [vmem:[#allocation5 + $0xa8] sm:$0xff]
    %v170 = vld [vmem:[#allocation5 + $0xb0] sm:$0xff]
    %v171 = vld [vmem:[#allocation5 + $0xb8] sm:$0xff]
    %v172 = vld [vmem:[#allocation5 + $0xc0] sm:$0xff]
    %v173 = vld [vmem:[#allocation5 + $0xc8] sm:$0xff]
    %v174 = vld [vmem:[#allocation5 + $0xd0] sm:$0xff]
    %v175 = vld [vmem:[#allocation5 + $0xd8] sm:$0xff]
    %v176 = vld [vmem:[#allocation5 + $0xe0] sm:$0xff]
    %v177 = vld [vmem:[#allocation5 + $0xe8] sm:$0xff]
    %v178 = vld [vmem:[#allocation5 + $0xf0] sm:$0xff]
    %v179 = vld [vmem:[#allocation5 + $0xf8] sm:$0xff]
    %v180 = vld [vmem:[#allocation5 + $0x100] sm:$0xff]
    %v181 = vld [vmem:[#allocation5 + $0x108] sm:$0xff]
    %v182 = vld [vmem:[#allocation5 + $0x110] sm:$0xff]
    %v183 = vld [vmem:[#allocation5 + $0x118] sm:$0xff]
    %v184 = vld [vmem:[#allocation5 + $0x120] sm:$0xff]
    %v185 = vld [vmem:[#allocation5 + $0x128] sm:$0xff]
    %v186 = vld [vmem:[#allocation5 + $0x130] sm:$0xff]
    %v187 = vld [vmem:[#allocation5 + $0x138] sm:$0xff]
    %v188 = vld [vmem:[#allocation5 + $0x140] sm:$0xff]
    %v189 = vld [vmem:[#allocation5 + $0x148] sm:$0xff]
    %v190 = vld [vmem:[#allocation5 + $0x150] sm:$0xff]
    %v191 = vld [vmem:[#allocation5 + $0x158] sm:$0xff]
    %v192 = vld [vmem:[#allocation5 + $0x160] sm:$0xff]
    %v193 = vld [vmem:[#allocation5 + $0x168] sm:$0xff]
    %v194 = vld [vmem:[#allocation5 + $0x170] sm:$0xff]
    %v195 = vld [vmem:[#allocation5 + $0x178] sm:$0xff]
    %v196 = vld [vmem:[#allocation5 + $0x180] sm:$0xff]
    %v197 = vld [vmem:[#allocation5 + $0x188] sm:$0xff]
    %v198 = vld [vmem:[#allocation5 + $0x190] sm:$0xff]
    %v199 = vld [vmem:[#allocation5 + $0x198] sm:$0xff]
    %v200 = vld [vmem:[#allocation5 + $0x1a0] sm:$0xff]
    %v201 = vld [vmem:[#allocation5 + $0x1a8] sm:$0xff]
    %v202 = vld [vmem:[#allocation5 + $0x1b0] sm:$0xff]
    %v203 = vld [vmem:[#allocation5 + $0x1b8] sm:$0xff]
    %v204 = vld [vmem:[#allocation5 + $0x1c0] sm:$0xff]
    %v205 = vld [vmem:[#allocation5 + $0x1c8] sm:$0xff]
    %v206 = vld [vmem:[#allocation5 + $0x1d0] sm:$0xff]
    %v207 = vld [vmem:[#allocation5 + $0x1d8] sm:$0xff]
    %v208 = vld [vmem:[#allocation5 + $0x1e0] sm:$0xff]
    %v209 = vld [vmem:[#allocation5 + $0x1e8] sm:$0xff]
    %v210 = vld [vmem:[#allocation5 + $0x1f0] sm:$0xff]
    %v211 = vld [vmem:[#allocation5 + $0x1f8] sm:$0xff]
    %v212 = vpack.c.bf16 %v146, %v144
    %v213 = vpack.c.bf16 %v147, %v145
    %v214 = vld [vmem:[%s2] sm:$0xf]
    %v215 = vunpack.c.l.bf16 %v214
    %v217 = vlaneseq
    %v218 = vshrl.u32 %v217, 7
    %v219 = vsub.s32 0, %v218
    %v220 = vrot.slane %v215, %v219
    %v221 = vlaneseq
    %v222 = vshrl.u32 %v221, 7
    %v223 = vsub.s32 2, %v222
    %v224 = vrot.slane %v215, %v223
    %v225 = vlaneseq
    %v226 = vshrl.u32 %v225, 7
    %v227 = vsub.s32 4, %v226
    %v228 = vrot.slane %v215, %v227
    %v229 = vlaneseq
    %v230 = vshrl.u32 %v229, 7
    %v231 = vsub.s32 6, %v230
    %v232 = vrot.slane %v215, %v231
    %v237 = vlaneseq
    %v238 = vshrl.u32 %v237, 7
    %v239 = vsub.s32 0, %v238
    %v240 = vrot.slane %v220, %v239
    %v241 = vlaneseq
    %v242 = vshrl.u32 %v241, 7
    %v243 = vsub.s32 0, %v242
    %v244 = vrot.slane %v224, %v243
    %v245 = vlaneseq
    %v246 = vshrl.u32 %v245, 7
    %v247 = vsub.s32 0, %v246
    %v248 = vrot.slane %v228, %v247
    %v249 = vlaneseq
    %v250 = vshrl.u32 %v249, 7
    %v251 = vsub.s32 0, %v250
    %v252 = vrot.slane %v232, %v251
    %v317 = vunpack.c.l.b16 %v148
    %v318 = vunpack.c.h.b16 %v148
    %v319 = vunpack.c.l.b16 %v149
    %v320 = vunpack.c.h.b16 %v149
    %v321 = vunpack.c.l.b16 %v150
    %v322 = vunpack.c.h.b16 %v150
    %v323 = vunpack.c.l.b16 %v151
    %v324 = vunpack.c.h.b16 %v151
    %v325 = vunpack.c.l.b16 %v152
    %v326 = vunpack.c.h.b16 %v152
    %v327 = vunpack.c.l.b16 %v153
    %v328 = vunpack.c.h.b16 %v153
    %v329 = vunpack.c.l.b16 %v154
    %v330 = vunpack.c.h.b16 %v154
    %v331 = vunpack.c.l.b16 %v155
    %v332 = vunpack.c.h.b16 %v155
    %v333 = vunpack.c.l.b16 %v156
    %v334 = vunpack.c.h.b16 %v156
    %v335 = vunpack.c.l.b16 %v157
    %v336 = vunpack.c.h.b16 %v157
    %v337 = vunpack.c.l.b16 %v158
    %v338 = vunpack.c.h.b16 %v158
    %v339 = vunpack.c.l.b16 %v159
    %v340 = vunpack.c.h.b16 %v159
    %v341 = vunpack.c.l.b16 %v160
    %v342 = vunpack.c.h.b16 %v160
    %v343 = vunpack.c.l.b16 %v161
    %v344 = vunpack.c.h.b16 %v161
    %v345 = vunpack.c.l.b16 %v162
    %v346 = vunpack.c.h.b16 %v162
    %v347 = vunpack.c.l.b16 %v163
    %v348 = vunpack.c.h.b16 %v163
    %v349 = vunpack.c.l.b16 %v164
    %v350 = vunpack.c.h.b16 %v164
    %v351 = vunpack.c.l.b16 %v165
    %v352 = vunpack.c.h.b16 %v165
    %v353 = vunpack.c.l.b16 %v166
    %v354 = vunpack.c.h.b16 %v166
    %v355 = vunpack.c.l.b16 %v167
    %v356 = vunpack.c.h.b16 %v167
    %v357 = vunpack.c.l.b16 %v168
    %v358 = vunpack.c.h.b16 %v168
    %v359 = vunpack.c.l.b16 %v169
    %v360 = vunpack.c.h.b16 %v169
    %v361 = vunpack.c.l.b16 %v170
    %v362 = vunpack.c.h.b16 %v170
    %v363 = vunpack.c.l.b16 %v171
    %v364 = vunpack.c.h.b16 %v171
    %v365 = vunpack.c.l.b16 %v172
    %v366 = vunpack.c.h.b16 %v172
    %v367 = vunpack.c.l.b16 %v173
    %v368 = vunpack.c.h.b16 %v173
    %v369 = vunpack.c.l.b16 %v174
    %v370 = vunpack.c.h.b16 %v174
    %v371 = vunpack.c.l.b16 %v175
    %v372 = vunpack.c.h.b16 %v175
    %v373 = vunpack.c.l.b16 %v176
    %v374 = vunpack.c.h.b16 %v176
    %v375 = vunpack.c.l.b16 %v177
    %v376 = vunpack.c.h.b16 %v177
    %v377 = vunpack.c.l.b16 %v178
    %v378 = vunpack.c.h.b16 %v178
    %v379 = vunpack.c.l.b16 %v179
    %v380 = vunpack.c.h.b16 %v179
    %v381 = vunpack.c.l.b16 %v180
    %v382 = vunpack.c.h.b16 %v180
    %v383 = vunpack.c.l.b16 %v181
    %v384 = vunpack.c.h.b16 %v181
    %v385 = vunpack.c.l.b16 %v182
    %v386 = vunpack.c.h.b16 %v182
    %v387 = vunpack.c.l.b16 %v183
    %v388 = vunpack.c.h.b16 %v183
    %v389 = vunpack.c.l.b16 %v184
    %v390 = vunpack.c.h.b16 %v184
    %v391 = vunpack.c.l.b16 %v185
    %v392 = vunpack.c.h.b16 %v185
    %v393 = vunpack.c.l.b16 %v186
    %v394 = vunpack.c.h.b16 %v186
    %v395 = vunpack.c.l.b16 %v187
    %v396 = vunpack.c.h.b16 %v187
    %v397 = vunpack.c.l.b16 %v188
    %v398 = vunpack.c.h.b16 %v188
    %v399 = vunpack.c.l.b16 %v189
    %v400 = vunpack.c.h.b16 %v189
    %v401 = vunpack.c.l.b16 %v190
    %v402 = vunpack.c.h.b16 %v190
    %v403 = vunpack.c.l.b16 %v191
    %v404 = vunpack.c.h.b16 %v191
    %v405 = vunpack.c.l.b16 %v192
    %v406 = vunpack.c.h.b16 %v192
    %v407 = vunpack.c.l.b16 %v193
    %v408 = vunpack.c.h.b16 %v193
    %v409 = vunpack.c.l.b16 %v194
    %v410 = vunpack.c.h.b16 %v194
    %v411 = vunpack.c.l.b16 %v195
    %v412 = vunpack.c.h.b16 %v195
    %v413 = vunpack.c.l.b16 %v196
    %v414 = vunpack.c.h.b16 %v196
    %v415 = vunpack.c.l.b16 %v197
    %v416 = vunpack.c.h.b16 %v197
    %v417 = vunpack.c.l.b16 %v198
    %v418 = vunpack.c.h.b16 %v198
    %v419 = vunpack.c.l.b16 %v199
    %v420 = vunpack.c.h.b16 %v199
    %v421 = vunpack.c.l.b16 %v200
    %v422 = vunpack.c.h.b16 %v200
    %v423 = vunpack.c.l.b16 %v201
    %v424 = vunpack.c.h.b16 %v201
    %v425 = vunpack.c.l.b16 %v202
    %v426 = vunpack.c.h.b16 %v202
    %v427 = vunpack.c.l.b16 %v203
    %v428 = vunpack.c.h.b16 %v203
    %v429 = vunpack.c.l.b16 %v204
    %v430 = vunpack.c.h.b16 %v204
    %v431 = vunpack.c.l.b16 %v205
    %v432 = vunpack.c.h.b16 %v205
    %v433 = vunpack.c.l.b16 %v206
    %v434 = vunpack.c.h.b16 %v206
    %v435 = vunpack.c.l.b16 %v207
    %v436 = vunpack.c.h.b16 %v207
    %v437 = vunpack.c.l.b16 %v208
    %v438 = vunpack.c.h.b16 %v208
    %v439 = vunpack.c.l.b16 %v209
    %v440 = vunpack.c.h.b16 %v209
    %v441 = vunpack.c.l.b16 %v210
    %v442 = vunpack.c.h.b16 %v210
    %v443 = vunpack.c.l.b16 %v211
    %v444 = vunpack.c.h.b16 %v211
    %v445 = vpack.c.b16 %v321, %v317
    %v446 = vpack.c.b16 %v322, %v318
    %v447 = vpack.c.b16 %v323, %v319
    %v448 = vpack.c.b16 %v324, %v320
    %v449 = vpack.c.b16 %v329, %v325
    %v450 = vpack.c.b16 %v330, %v326
    %v451 = vpack.c.b16 %v331, %v327
    %v452 = vpack.c.b16 %v332, %v328
    %v453 = vpack.c.b16 %v337, %v333
    %v454 = vpack.c.b16 %v338, %v334
    %v455 = vpack.c.b16 %v339, %v335
    %v456 = vpack.c.b16 %v340, %v336
    %v457 = vpack.c.b16 %v345, %v341
    %v458 = vpack.c.b16 %v346, %v342
    %v459 = vpack.c.b16 %v347, %v343
    %v460 = vpack.c.b16 %v348, %v344
    %v461 = vpack.c.b16 %v353, %v349
    %v462 = vpack.c.b16 %v354, %v350
    %v463 = vpack.c.b16 %v355, %v351
    %v464 = vpack.c.b16 %v356, %v352
    %v465 = vpack.c.b16 %v361, %v357
    %v466 = vpack.c.b16 %v362, %v358
    %v467 = vpack.c.b16 %v363, %v359
    %v468 = vpack.c.b16 %v364, %v360
    %v469 = vpack.c.b16 %v369, %v365
    %v470 = vpack.c.b16 %v370, %v366
    %v471 = vpack.c.b16 %v371, %v367
    %v472 = vpack.c.b16 %v372, %v368
    %v473 = vpack.c.b16 %v377, %v373
    %v474 = vpack.c.b16 %v378, %v374
    %v475 = vpack.c.b16 %v379, %v375
    %v476 = vpack.c.b16 %v380, %v376
    %v477 = vpack.c.b16 %v385, %v381
    %v478 = vpack.c.b16 %v386, %v382
    %v479 = vpack.c.b16 %v387, %v383
    %v480 = vpack.c.b16 %v388, %v384
    %v481 = vpack.c.b16 %v393, %v389
    %v482 = vpack.c.b16 %v394, %v390
    %v483 = vpack.c.b16 %v395, %v391
    %v484 = vpack.c.b16 %v396, %v392
    %v485 = vpack.c.b16 %v401, %v397
    %v486 = vpack.c.b16 %v402, %v398
    %v487 = vpack.c.b16 %v403, %v399
    %v488 = vpack.c.b16 %v404, %v400
    %v489 = vpack.c.b16 %v409, %v405
    %v490 = vpack.c.b16 %v410, %v406
    %v491 = vpack.c.b16 %v411, %v407
    %v492 = vpack.c.b16 %v412, %v408
    %v493 = vpack.c.b16 %v417, %v413
    %v494 = vpack.c.b16 %v418, %v414
    %v495 = vpack.c.b16 %v419, %v415
    %v496 = vpack.c.b16 %v420, %v416
    %v497 = vpack.c.b16 %v425, %v421
    %v498 = vpack.c.b16 %v426, %v422
    %v499 = vpack.c.b16 %v427, %v423
    %v500 = vpack.c.b16 %v428, %v424
    %v501 = vpack.c.b16 %v433, %v429
    %v502 = vpack.c.b16 %v434, %v430
    %v503 = vpack.c.b16 %v435, %v431
    %v504 = vpack.c.b16 %v436, %v432
    %v505 = vpack.c.b16 %v441, %v437
    %v506 = vpack.c.b16 %v442, %v438
    %v507 = vpack.c.b16 %v443, %v439
    %v508 = vpack.c.b16 %v444, %v440
    %573 = vmatprep.subr.bf16.mxu0 %v446
    %574 = vmatpush1.bf16.msra.mxu0 %v445
    %575 = vmatprep.subr.bf16.mxu0 %v450
    %576 = vmatpush1.bf16.msra.mxu0 %v449
    %577 = vmatprep.subr.bf16.mxu0 %v454
    %578 = vmatpush1.bf16.msra.mxu0 %v453
    %579 = vmatprep.subr.bf16.mxu0 %v458
    %580 = vmatpush1.bf16.msra.mxu0 %v457
    %581 = vmatprep.subr.bf16.mxu0 %v462
    %582 = vmatpush1.bf16.msra.mxu0 %v461
    %583 = vmatprep.subr.bf16.mxu0 %v466
    %584 = vmatpush1.bf16.msra.mxu0 %v465
    %585 = vmatprep.subr.bf16.mxu0 %v470
    %586 = vmatpush1.bf16.msra.mxu0 %v469
    %587 = vmatprep.subr.bf16.mxu0 %v474
    %588 = vmatpush1.bf16.msra.mxu0 %v473
    %589 = vmatprep.subr.bf16.mxu0 %v478
    %590 = vmatpush1.bf16.msra.mxu0 %v477
    %591 = vmatprep.subr.bf16.mxu0 %v482
    %592 = vmatpush1.bf16.msra.mxu0 %v481
    %593 = vmatprep.subr.bf16.mxu0 %v486
    %594 = vmatpush1.bf16.msra.mxu0 %v485
    %595 = vmatprep.subr.bf16.mxu0 %v490
    %596 = vmatpush1.bf16.msra.mxu0 %v489
    %597 = vmatprep.subr.bf16.mxu0 %v494
    %598 = vmatpush1.bf16.msra.mxu0 %v493
    %599 = vmatprep.subr.bf16.mxu0 %v498
    %600 = vmatpush1.bf16.msra.mxu0 %v497
    %601 = vmatprep.subr.bf16.mxu0 %v502
    %602 = vmatpush1.bf16.msra.mxu0 %v501
    %603 = vmatprep.subr.bf16.mxu0 %v506
    %604 = vmatpush1.bf16.msra.mxu0 %v505
    %605 = vmatprep.mubr.bf16.mxu0 %v213
    %606 = vmatmul.mubr.bf16.gmra.mrb[0].mxu0 %v212
    %v607 = vpop.f32.mrb[0].mxu0
    %v608 = vadd.f32 %v240, %v607
    %v609 = vpop.f32.mrb[0].mxu0
    %v610 = vadd.f32 %v244, %v609
    %v611 = vpop.f32.mrb[0].mxu0
    %v612 = vadd.f32 %v240, %v611
    %v613 = vpop.f32.mrb[0].mxu0
    %v614 = vadd.f32 %v244, %v613
    %615 = vdwg.mxu0
    %616 = vmatprep.subr.bf16.mxu0 %v448
    %617 = vmatpush1.bf16.msra.mxu0 %v447
    %618 = vmatprep.subr.bf16.mxu0 %v452
    %619 = vmatpush1.bf16.msra.mxu0 %v451
    %620 = vmatprep.subr.bf16.mxu0 %v456
    %621 = vmatpush1.bf16.msra.mxu0 %v455
    %622 = vmatprep.subr.bf16.mxu0 %v460
    %623 = vmatpush1.bf16.msra.mxu0 %v459
    %624 = vmatprep.subr.bf16.mxu0 %v464
    %625 = vmatpush1.bf16.msra.mxu0 %v463
    %626 = vmatprep.subr.bf16.mxu0 %v468
    %627 = vmatpush1.bf16.msra.mxu0 %v467
    %628 = vmatprep.subr.bf16.mxu0 %v472
    %629 = vmatpush1.bf16.msra.mxu0 %v471
    %630 = vmatprep.subr.bf16.mxu0 %v476
    %631 = vmatpush1.bf16.msra.mxu0 %v475
    %632 = vmatprep.subr.bf16.mxu0 %v480
    %633 = vmatpush1.bf16.msra.mxu0 %v479
    %634 = vmatprep.subr.bf16.mxu0 %v484
    %635 = vmatpush1.bf16.msra.mxu0 %v483
    %636 = vmatprep.subr.bf16.mxu0 %v488
    %637 = vmatpush1.bf16.msra.mxu0 %v487
    %638 = vmatprep.subr.bf16.mxu0 %v492
    %639 = vmatpush1.bf16.msra.mxu0 %v491
    %640 = vmatprep.subr.bf16.mxu0 %v496
    %641 = vmatpush1.bf16.msra.mxu0 %v495
    %642 = vmatprep.subr.bf16.mxu0 %v500
    %643 = vmatpush1.bf16.msra.mxu0 %v499
    %644 = vmatprep.subr.bf16.mxu0 %v504
    %645 = vmatpush1.bf16.msra.mxu0 %v503
    %646 = vmatprep.subr.bf16.mxu0 %v508
    %647 = vmatpush1.bf16.msra.mxu0 %v507
    %648 = vmatprep.mubr.bf16.mxu0 %v213
    %649 = vmatmul.mubr.bf16.gmra.mrb[0].mxu0 %v212
    %v650 = vpop.f32.mrb[0].mxu0
    %v651 = vadd.f32 %v248, %v650
    %v652 = vpop.f32.mrb[0].mxu0
    %v653 = vadd.f32 %v252, %v652
    %v654 = vpop.f32.mrb[0].mxu0
    %v655 = vadd.f32 %v248, %v654
    %v656 = vpop.f32.mrb[0].mxu0
    %v657 = vadd.f32 %v252, %v656
    %658 = vdwg.mxu0
    %v659 = vmax.f32 %v608, 0.0
    %v660 = vmax.f32 %v610, 0.0
    %v661 = vmax.f32 %v651, 0.0
    %v662 = vmax.f32 %v653, 0.0
    %v663 = vmax.f32 %v612, 0.0
    %v664 = vmax.f32 %v614, 0.0
    %v665 = vmax.f32 %v655, 0.0
    %v666 = vmax.f32 %v657, 0.0
    %v667 = vld [vmem:[#allocation7] sm:$0xff]
    %v668 = vld [vmem:[#allocation7 + $0x8] sm:$0xff]
    %v669 = vld [vmem:[#allocation7 + $0x10] sm:$0xff]
    %v670 = vld [vmem:[#allocation7 + $0x18] sm:$0xff]
    %v671 = vld [vmem:[#allocation7 + $0x20] sm:$0xff]
    %v672 = vld [vmem:[#allocation7 + $0x28] sm:$0xff]
    %v673 = vld [vmem:[#allocation7 + $0x30] sm:$0xff]
    %v674 = vld [vmem:[#allocation7 + $0x38] sm:$0xff]
    %v675 = vld [vmem:[#allocation7 + $0x40] sm:$0xff]
    %v676 = vld [vmem:[#allocation7 + $0x48] sm:$0xff]
    %v677 = vld [vmem:[#allocation7 + $0x50] sm:$0xff]
    %v678 = vld [vmem:[#allocation7 + $0x58] sm:$0xff]
    %v679 = vld [vmem:[#allocation7 + $0x60] sm:$0xff]
    %v680 = vld [vmem:[#allocation7 + $0x68] sm:$0xff]
    %v681 = vld [vmem:[#allocation7 + $0x70] sm:$0xff]
    %v682 = vld [vmem:[#allocation7 + $0x78] sm:$0xff]
    %v683 = vld [vmem:[#allocation7 + $0x80] sm:$0xff]
    %v684 = vld [vmem:[#allocation7 + $0x88] sm:$0xff]
    %v685 = vld [vmem:[#allocation7 + $0x90] sm:$0xff]
    %v686 = vld [vmem:[#allocation7 + $0x98] sm:$0xff]
    %v687 = vld [vmem:[#allocation7 + $0xa0] sm:$0xff]
    %v688 = vld [vmem:[#allocation7 + $0xa8] sm:$0xff]
    %v689 = vld [vmem:[#allocation7 + $0xb0] sm:$0xff]
    %v690 = vld [vmem:[#allocation7 + $0xb8] sm:$0xff]
    %v691 = vld [vmem:[#allocation7 + $0xc0] sm:$0xff]
    %v692 = vld [vmem:[#allocation7 + $0xc8] sm:$0xff]
    %v693 = vld [vmem:[#allocation7 + $0xd0] sm:$0xff]
    %v694 = vld [vmem:[#allocation7 + $0xd8] sm:$0xff]
    %v695 = vld [vmem:[#allocation7 + $0xe0] sm:$0xff]
    %v696 = vld [vmem:[#allocation7 + $0xe8] sm:$0xff]
    %v697 = vld [vmem:[#allocation7 + $0xf0] sm:$0xff]
    %v698 = vld [vmem:[#allocation7 + $0xf8] sm:$0xff]
    %v699 = vld [vmem:[#allocation7 + $0x100] sm:$0xff]
    %v700 = vld [vmem:[#allocation7 + $0x108] sm:$0xff]
    %v701 = vld [vmem:[#allocation7 + $0x110] sm:$0xff]
    %v702 = vld [vmem:[#allocation7 + $0x118] sm:$0xff]
    %v703 = vld [vmem:[#allocation7 + $0x120] sm:$0xff]
    %v704 = vld [vmem:[#allocation7 + $0x128] sm:$0xff]
    %v705 = vld [vmem:[#allocation7 + $0x130] sm:$0xff]
    %v706 = vld [vmem:[#allocation7 + $0x138] sm:$0xff]
    %v707 = vld [vmem:[#allocation7 + $0x140] sm:$0xff]
    %v708 = vld [vmem:[#allocation7 + $0x148] sm:$0xff]
    %v709 = vld [vmem:[#allocation7 + $0x150] sm:$0xff]
    %v710 = vld [vmem:[#allocation7 + $0x158] sm:$0xff]
    %v711 = vld [vmem:[#allocation7 + $0x160] sm:$0xff]
    %v712 = vld [vmem:[#allocation7 + $0x168] sm:$0xff]
    %v713 = vld [vmem:[#allocation7 + $0x170] sm:$0xff]
    %v714 = vld [vmem:[#allocation7 + $0x178] sm:$0xff]
    %v715 = vld [vmem:[#allocation7 + $0x180] sm:$0xff]
    %v716 = vld [vmem:[#allocation7 + $0x188] sm:$0xff]
    %v717 = vld [vmem:[#allocation7 + $0x190] sm:$0xff]
    %v718 = vld [vmem:[#allocation7 + $0x198] sm:$0xff]
    %v719 = vld [vmem:[#allocation7 + $0x1a0] sm:$0xff]
    %v720 = vld [vmem:[#allocation7 + $0x1a8] sm:$0xff]
    %v721 = vld [vmem:[#allocation7 + $0x1b0] sm:$0xff]
    %v722 = vld [vmem:[#allocation7 + $0x1b8] sm:$0xff]
    %v723 = vld [vmem:[#allocation7 + $0x1c0] sm:$0xff]
    %v724 = vld [vmem:[#allocation7 + $0x1c8] sm:$0xff]
    %v725 = vld [vmem:[#allocation7 + $0x1d0] sm:$0xff]
    %v726 = vld [vmem:[#allocation7 + $0x1d8] sm:$0xff]
    %v727 = vld [vmem:[#allocation7 + $0x1e0] sm:$0xff]
    %v728 = vld [vmem:[#allocation7 + $0x1e8] sm:$0xff]
    %v729 = vld [vmem:[#allocation7 + $0x1f0] sm:$0xff]
    %v730 = vld [vmem:[#allocation7 + $0x1f8] sm:$0xff]
    %v731 = vpack.c.bf16 %v663, %v659
    %v732 = vpack.c.bf16 %v664, %v660
    %v733 = vpack.c.bf16 %v665, %v661
    %v734 = vpack.c.bf16 %v666, %v662
    %v735 = vld [vmem:[%s4] sm:$0x3]
    %v736 = vunpack.c.l.bf16 %v735
    %v738 = vlaneseq
    %v739 = vshrl.u32 %v738, 7
    %v740 = vsub.s32 0, %v739
    %v741 = vrot.slane %v736, %v740
    %v742 = vlaneseq
    %v743 = vshrl.u32 %v742, 7
    %v744 = vsub.s32 2, %v743
    %v745 = vrot.slane %v736, %v744
    %v748 = vlaneseq
    %v749 = vshrl.u32 %v748, 7
    %v750 = vsub.s32 0, %v749
    %v751 = vrot.slane %v741, %v750
    %v752 = vlaneseq
    %v753 = vshrl.u32 %v752, 7
    %v754 = vsub.s32 0, %v753
    %v755 = vrot.slane %v745, %v754
    %v820 = vunpack.c.l.b16 %v667
    %v821 = vunpack.c.h.b16 %v667
    %v822 = vunpack.c.l.b16 %v668
    %v823 = vunpack.c.h.b16 %v668
    %v824 = vunpack.c.l.b16 %v669
    %v825 = vunpack.c.h.b16 %v669
    %v826 = vunpack.c.l.b16 %v670
    %v827 = vunpack.c.h.b16 %v670
    %v828 = vunpack.c.l.b16 %v671
    %v829 = vunpack.c.h.b16 %v671
    %v830 = vunpack.c.l.b16 %v672
    %v831 = vunpack.c.h.b16 %v672
    %v832 = vunpack.c.l.b16 %v673
    %v833 = vunpack.c.h.b16 %v673
    %v834 = vunpack.c.l.b16 %v674
    %v835 = vunpack.c.h.b16 %v674
    %v836 = vunpack.c.l.b16 %v675
    %v837 = vunpack.c.h.b16 %v675
    %v838 = vunpack.c.l.b16 %v676
    %v839 = vunpack.c.h.b16 %v676
    %v840 = vunpack.c.l.b16 %v677
    %v841 = vunpack.c.h.b16 %v677
    %v842 = vunpack.c.l.b16 %v678
    %v843 = vunpack.c.h.b16 %v678
    %v844 = vunpack.c.l.b16 %v679
    %v845 = vunpack.c.h.b16 %v679
    %v846 = vunpack.c.l.b16 %v680
    %v847 = vunpack.c.h.b16 %v680
    %v848 = vunpack.c.l.b16 %v681
    %v849 = vunpack.c.h.b16 %v681
    %v850 = vunpack.c.l.b16 %v682
    %v851 = vunpack.c.h.b16 %v682
    %v852 = vunpack.c.l.b16 %v683
    %v853 = vunpack.c.h.b16 %v683
    %v854 = vunpack.c.l.b16 %v684
    %v855 = vunpack.c.h.b16 %v684
    %v856 = vunpack.c.l.b16 %v685
    %v857 = vunpack.c.h.b16 %v685
    %v858 = vunpack.c.l.b16 %v686
    %v859 = vunpack.c.h.b16 %v686
    %v860 = vunpack.c.l.b16 %v687
    %v861 = vunpack.c.h.b16 %v687
    %v862 = vunpack.c.l.b16 %v688
    %v863 = vunpack.c.h.b16 %v688
    %v864 = vunpack.c.l.b16 %v689
    %v865 = vunpack.c.h.b16 %v689
    %v866 = vunpack.c.l.b16 %v690
    %v867 = vunpack.c.h.b16 %v690
    %v868 = vunpack.c.l.b16 %v691
    %v869 = vunpack.c.h.b16 %v691
    %v870 = vunpack.c.l.b16 %v692
    %v871 = vunpack.c.h.b16 %v692
    %v872 = vunpack.c.l.b16 %v693
    %v873 = vunpack.c.h.b16 %v693
    %v874 = vunpack.c.l.b16 %v694
    %v875 = vunpack.c.h.b16 %v694
    %v876 = vunpack.c.l.b16 %v695
    %v877 = vunpack.c.h.b16 %v695
    %v878 = vunpack.c.l.b16 %v696
    %v879 = vunpack.c.h.b16 %v696
    %v880 = vunpack.c.l.b16 %v697
    %v881 = vunpack.c.h.b16 %v697
    %v882 = vunpack.c.l.b16 %v698
    %v883 = vunpack.c.h.b16 %v698
    %v884 = vunpack.c.l.b16 %v699
    %v885 = vunpack.c.h.b16 %v699
    %v886 = vunpack.c.l.b16 %v700
    %v887 = vunpack.c.h.b16 %v700
    %v888 = vunpack.c.l.b16 %v701
    %v889 = vunpack.c.h.b16 %v701
    %v890 = vunpack.c.l.b16 %v702
    %v891 = vunpack.c.h.b16 %v702
    %v892 = vunpack.c.l.b16 %v703
    %v893 = vunpack.c.h.b16 %v703
    %v894 = vunpack.c.l.b16 %v704
    %v895 = vunpack.c.h.b16 %v704
    %v896 = vunpack.c.l.b16 %v705
    %v897 = vunpack.c.h.b16 %v705
    %v898 = vunpack.c.l.b16 %v706
    %v899 = vunpack.c.h.b16 %v706
    %v900 = vunpack.c.l.b16 %v707
    %v901 = vunpack.c.h.b16 %v707
    %v902 = vunpack.c.l.b16 %v708
    %v903 = vunpack.c.h.b16 %v708
    %v904 = vunpack.c.l.b16 %v709
    %v905 = vunpack.c.h.b16 %v709
    %v906 = vunpack.c.l.b16 %v710
    %v907 = vunpack.c.h.b16 %v710
    %v908 = vunpack.c.l.b16 %v711
    %v909 = vunpack.c.h.b16 %v711
    %v910 = vunpack.c.l.b16 %v712
    %v911 = vunpack.c.h.b16 %v712
    %v912 = vunpack.c.l.b16 %v713
    %v913 = vunpack.c.h.b16 %v713
    %v914 = vunpack.c.l.b16 %v714
    %v915 = vunpack.c.h.b16 %v714
    %v916 = vunpack.c.l.b16 %v715
    %v917 = vunpack.c.h.b16 %v715
    %v918 = vunpack.c.l.b16 %v716
    %v919 = vunpack.c.h.b16 %v716
    %v920 = vunpack.c.l.b16 %v717
    %v921 = vunpack.c.h.b16 %v717
    %v922 = vunpack.c.l.b16 %v718
    %v923 = vunpack.c.h.b16 %v718
    %v924 = vunpack.c.l.b16 %v719
    %v925 = vunpack.c.h.b16 %v719
    %v926 = vunpack.c.l.b16 %v720
    %v927 = vunpack.c.h.b16 %v720
    %v928 = vunpack.c.l.b16 %v721
    %v929 = vunpack.c.h.b16 %v721
    %v930 = vunpack.c.l.b16 %v722
    %v931 = vunpack.c.h.b16 %v722
    %v932 = vunpack.c.l.b16 %v723
    %v933 = vunpack.c.h.b16 %v723
    %v934 = vunpack.c.l.b16 %v724
    %v935 = vunpack.c.h.b16 %v724
    %v936 = vunpack.c.l.b16 %v725
    %v937 = vunpack.c.h.b16 %v725
    %v938 = vunpack.c.l.b16 %v726
    %v939 = vunpack.c.h.b16 %v726
    %v940 = vunpack.c.l.b16 %v727
    %v941 = vunpack.c.h.b16 %v727
    %v942 = vunpack.c.l.b16 %v728
    %v943 = vunpack.c.h.b16 %v728
    %v944 = vunpack.c.l.b16 %v729
    %v945 = vunpack.c.h.b16 %v729
    %v946 = vunpack.c.l.b16 %v730
    %v947 = vunpack.c.h.b16 %v730
    %v948 = vpack.c.b16 %v822, %v820
    %v949 = vpack.c.b16 %v823, %v821
    %v950 = vpack.c.b16 %v826, %v824
    %v951 = vpack.c.b16 %v827, %v825
    %v952 = vpack.c.b16 %v830, %v828
    %v953 = vpack.c.b16 %v831, %v829
    %v954 = vpack.c.b16 %v834, %v832
    %v955 = vpack.c.b16 %v835, %v833
    %v956 = vpack.c.b16 %v838, %v836
    %v957 = vpack.c.b16 %v839, %v837
    %v958 = vpack.c.b16 %v842, %v840
    %v959 = vpack.c.b16 %v843, %v841
    %v960 = vpack.c.b16 %v846, %v844
    %v961 = vpack.c.b16 %v847, %v845
    %v962 = vpack.c.b16 %v850, %v848
    %v963 = vpack.c.b16 %v851, %v849
    %v964 = vpack.c.b16 %v854, %v852
    %v965 = vpack.c.b16 %v855, %v853
    %v966 = vpack.c.b16 %v858, %v856
    %v967 = vpack.c.b16 %v859, %v857
    %v968 = vpack.c.b16 %v862, %v860
    %v969 = vpack.c.b16 %v863, %v861
    %v970 = vpack.c.b16 %v866, %v864
    %v971 = vpack.c.b16 %v867, %v865
    %v972 = vpack.c.b16 %v870, %v868
    %v973 = vpack.c.b16 %v871, %v869
    %v974 = vpack.c.b16 %v874, %v872
    %v975 = vpack.c.b16 %v875, %v873
    %v976 = vpack.c.b16 %v878, %v876
    %v977 = vpack.c.b16 %v879, %v877
    %v978 = vpack.c.b16 %v882, %v880
    %v979 = vpack.c.b16 %v883, %v881
    %v980 = vpack.c.b16 %v886, %v884
    %v981 = vpack.c.b16 %v887, %v885
    %v982 = vpack.c.b16 %v890, %v888
    %v983 = vpack.c.b16 %v891, %v889
    %v984 = vpack.c.b16 %v894, %v892
    %v985 = vpack.c.b16 %v895, %v893
    %v986 = vpack.c.b16 %v898, %v896
    %v987 = vpack.c.b16 %v899, %v897
    %v988 = vpack.c.b16 %v902, %v900
    %v989 = vpack.c.b16 %v903, %v901
    %v990 = vpack.c.b16 %v906, %v904
    %v991 = vpack.c.b16 %v907, %v905
    %v992 = vpack.c.b16 %v910, %v908
    %v993 = vpack.c.b16 %v911, %v909
    %v994 = vpack.c.b16 %v914, %v912
    %v995 = vpack.c.b16 %v915, %v913
    %v996 = vpack.c.b16 %v918, %v916
    %v997 = vpack.c.b16 %v919, %v917
    %v998 = vpack.c.b16 %v922, %v920
    %v999 = vpack.c.b16 %v923, %v921
    %v1000 = vpack.c.b16 %v926, %v924
    %v1001 = vpack.c.b16 %v927, %v925
    %v1002 = vpack.c.b16 %v930, %v928
    %v1003 = vpack.c.b16 %v931, %v929
    %v1004 = vpack.c.b16 %v934, %v932
    %v1005 = vpack.c.b16 %v935, %v933
    %v1006 = vpack.c.b16 %v938, %v936
    %v1007 = vpack.c.b16 %v939, %v937
    %v1008 = vpack.c.b16 %v942, %v940
    %v1009 = vpack.c.b16 %v943, %v941
    %v1010 = vpack.c.b16 %v946, %v944
    %v1011 = vpack.c.b16 %v947, %v945
    %1076 = vmatprep.subr.bf16.mxu0 %v949
    %1077 = vmatpush1.bf16.msra.mxu0 %v948
    %1078 = vmatprep.subr.bf16.mxu0 %v951
    %1079 = vmatpush1.bf16.msra.mxu0 %v950
    %1080 = vmatprep.subr.bf16.mxu0 %v953
    %1081 = vmatpush1.bf16.msra.mxu0 %v952
    %1082 = vmatprep.subr.bf16.mxu0 %v955
    %1083 = vmatpush1.bf16.msra.mxu0 %v954
    %1084 = vmatprep.subr.bf16.mxu0 %v957
    %1085 = vmatpush1.bf16.msra.mxu0 %v956
    %1086 = vmatprep.subr.bf16.mxu0 %v959
    %1087 = vmatpush1.bf16.msra.mxu0 %v958
    %1088 = vmatprep.subr.bf16.mxu0 %v961
    %1089 = vmatpush1.bf16.msra.mxu0 %v960
    %1090 = vmatprep.subr.bf16.mxu0 %v963
    %1091 = vmatpush1.bf16.msra.mxu0 %v962
    %1092 = vmatprep.subr.bf16.mxu0 %v965
    %1093 = vmatpush1.bf16.msra.mxu0 %v964
    %1094 = vmatprep.subr.bf16.mxu0 %v967
    %1095 = vmatpush1.bf16.msra.mxu0 %v966
    %1096 = vmatprep.subr.bf16.mxu0 %v969
    %1097 = vmatpush1.bf16.msra.mxu0 %v968
    %1098 = vmatprep.subr.bf16.mxu0 %v971
    %1099 = vmatpush1.bf16.msra.mxu0 %v970
    %1100 = vmatprep.subr.bf16.mxu0 %v973
    %1101 = vmatpush1.bf16.msra.mxu0 %v972
    %1102 = vmatprep.subr.bf16.mxu0 %v975
    %1103 = vmatpush1.bf16.msra.mxu0 %v974
    %1104 = vmatprep.subr.bf16.mxu0 %v977
    %1105 = vmatpush1.bf16.msra.mxu0 %v976
    %1106 = vmatprep.subr.bf16.mxu0 %v979
    %1107 = vmatpush1.bf16.msra.mxu0 %v978
    %1108 = vmatprep.mubr.bf16.mxu0 %v732
    %1109 = vmatmul.mubr.bf16.gmra.mrb[0].mxu0 %v731
    %v1110 = vpop.f32.mrb[0].mxu0
    %v1111 = vadd.f32 %v751, %v1110
    %v1112 = vpop.f32.mrb[0].mxu0
    %v1113 = vadd.f32 %v755, %v1112
    %v1114 = vpop.f32.mrb[0].mxu0
    %v1115 = vadd.f32 %v751, %v1114
    %v1116 = vpop.f32.mrb[0].mxu0
    %v1117 = vadd.f32 %v755, %v1116
    %1118 = vdwg.mxu0
    %1119 = vmatprep.subr.bf16.mxu0 %v981
    %1120 = vmatpush1.bf16.msra.mxu0 %v980
    %1121 = vmatprep.subr.bf16.mxu0 %v983
    %1122 = vmatpush1.bf16.msra.mxu0 %v982
    %1123 = vmatprep.subr.bf16.mxu0 %v985
    %1124 = vmatpush1.bf16.msra.mxu0 %v984
    %1125 = vmatprep.subr.bf16.mxu0 %v987
    %1126 = vmatpush1.bf16.msra.mxu0 %v986
    %1127 = vmatprep.subr.bf16.mxu0 %v989
    %1128 = vmatpush1.bf16.msra.mxu0 %v988
    %1129 = vmatprep.subr.bf16.mxu0 %v991
    %1130 = vmatpush1.bf16.msra.mxu0 %v990
    %1131 = vmatprep.subr.bf16.mxu0 %v993
    %1132 = vmatpush1.bf16.msra.mxu0 %v992
    %1133 = vmatprep.subr.bf16.mxu0 %v995
    %1134 = vmatpush1.bf16.msra.mxu0 %v994
    %1135 = vmatprep.subr.bf16.mxu0 %v997
    %1136 = vmatpush1.bf16.msra.mxu0 %v996
    %1137 = vmatprep.subr.bf16.mxu0 %v999
    %1138 = vmatpush1.bf16.msra.mxu0 %v998
    %1139 = vmatprep.subr.bf16.mxu0 %v1001
    %1140 = vmatpush1.bf16.msra.mxu0 %v1000
    %1141 = vmatprep.subr.bf16.mxu0 %v1003
    %1142 = vmatpush1.bf16.msra.mxu0 %v1002
    %1143 = vmatprep.subr.bf16.mxu0 %v1005
    %1144 = vmatpush1.bf16.msra.mxu0 %v1004
    %1145 = vmatprep.subr.bf16.mxu0 %v1007
    %1146 = vmatpush1.bf16.msra.mxu0 %v1006
    %1147 = vmatprep.subr.bf16.mxu0 %v1009
    %1148 = vmatpush1.bf16.msra.mxu0 %v1008
    %1149 = vmatprep.subr.bf16.mxu0 %v1011
    %1150 = vmatpush1.bf16.msra.mxu0 %v1010
    %1151 = vmatprep.mubr.bf16.mxu0 %v734
    %1152 = vmatmul.mubr.bf16.gmra.mrb[0].mxu0 %v733
    %v1153 = vpop.f32.mrb[0].mxu0
    %v1154 = vadd.f32 %v1111, %v1153
    %v1155 = vpop.f32.mrb[0].mxu0
    %v1156 = vadd.f32 %v1113, %v1155
    %v1157 = vpop.f32.mrb[0].mxu0
    %v1158 = vadd.f32 %v1115, %v1157
    %v1159 = vpop.f32.mrb[0].mxu0
    %v1160 = vadd.f32 %v1117, %v1159
    %1161 = vdwg.mxu0
    %v1162 = vmax.f32 %v1154, 0.0
    %v1163 = vmax.f32 %v1156, 0.0
    %v1164 = vmax.f32 %v1158, 0.0
    %v1165 = vmax.f32 %v1160, 0.0
    %v1166 = vld [vmem:[#allocation8] sm:$0xf]
    %v1167 = vld [vmem:[#allocation8 + $0x4] sm:$0xf]
    %v1168 = vld [vmem:[#allocation8 + $0x8] sm:$0xf]
    %v1169 = vld [vmem:[#allocation8 + $0xc] sm:$0xf]
    %v1170 = vld [vmem:[#allocation8 + $0x10] sm:$0xf]
    %v1171 = vld [vmem:[#allocation8 + $0x14] sm:$0xf]
    %v1172 = vld [vmem:[#allocation8 + $0x18] sm:$0xf]
    %v1173 = vld [vmem:[#allocation8 + $0x1c] sm:$0xf]
    %v1174 = vld [vmem:[#allocation8 + $0x20] sm:$0xf]
    %v1175 = vld [vmem:[#allocation8 + $0x24] sm:$0xf]
    %v1176 = vld [vmem:[#allocation8 + $0x28] sm:$0xf]
    %v1177 = vld [vmem:[#allocation8 + $0x2c] sm:$0xf]
    %v1178 = vld [vmem:[#allocation8 + $0x30] sm:$0xf]
    %v1179 = vld [vmem:[#allocation8 + $0x34] sm:$0xf]
    %v1180 = vld [vmem:[#allocation8 + $0x38] sm:$0xf]
    %v1181 = vld [vmem:[#allocation8 + $0x3c] sm:$0xf]
    %v1182 = vld [vmem:[#allocation8 + $0x40] sm:$0xf]
    %v1183 = vld [vmem:[#allocation8 + $0x44] sm:$0xf]
    %v1184 = vld [vmem:[#allocation8 + $0x48] sm:$0xf]
    %v1185 = vld [vmem:[#allocation8 + $0x4c] sm:$0xf]
    %v1186 = vld [vmem:[#allocation8 + $0x50] sm:$0xf]
    %v1187 = vld [vmem:[#allocation8 + $0x54] sm:$0xf]
    %v1188 = vld [vmem:[#allocation8 + $0x58] sm:$0xf]
    %v1189 = vld [vmem:[#allocation8 + $0x5c] sm:$0xf]
    %v1190 = vld [vmem:[#allocation8 + $0x60] sm:$0xf]
    %v1191 = vld [vmem:[#allocation8 + $0x64] sm:$0xf]
    %v1192 = vld [vmem:[#allocation8 + $0x68] sm:$0xf]
    %v1193 = vld [vmem:[#allocation8 + $0x6c] sm:$0xf]
    %v1194 = vld [vmem:[#allocation8 + $0x70] sm:$0xf]
    %v1195 = vld [vmem:[#allocation8 + $0x74] sm:$0xf]
    %v1196 = vld [vmem:[#allocation8 + $0x78] sm:$0xf]
    %v1197 = vld [vmem:[#allocation8 + $0x7c] sm:$0xf]
    %v1198 = vpack.c.bf16 %v1164, %v1162
    %v1199 = vpack.c.bf16 %v1165, %v1163
    %v1200 = vld [vmem:[%s6] sm:$0x1]
    %v1201 = vunpack.c.l.bf16 %v1200
    %v1202 = vlaneseq
    %v1203 = vshrl.u32 %v1202, 7
    %v1204 = vsub.s32 0, %v1203
    %v1205 = vrot.slane %v1201, %v1204
    %v1238 = vunpack.c.l.b16 %v1166
    %v1239 = vunpack.c.l.b16 %v1167
    %v1240 = vunpack.c.l.b16 %v1168
    %v1241 = vunpack.c.l.b16 %v1169
    %v1242 = vunpack.c.l.b16 %v1170
    %v1243 = vunpack.c.l.b16 %v1171
    %v1244 = vunpack.c.l.b16 %v1172
    %v1245 = vunpack.c.l.b16 %v1173
    %v1246 = vunpack.c.l.b16 %v1174
    %v1247 = vunpack.c.l.b16 %v1175
    %v1248 = vunpack.c.l.b16 %v1176
    %v1249 = vunpack.c.l.b16 %v1177
    %v1250 = vunpack.c.l.b16 %v1178
    %v1251 = vunpack.c.l.b16 %v1179
    %v1252 = vunpack.c.l.b16 %v1180
    %v1253 = vunpack.c.l.b16 %v1181
    %v1254 = vunpack.c.l.b16 %v1182
    %v1255 = vunpack.c.l.b16 %v1183
    %v1256 = vunpack.c.l.b16 %v1184
    %v1257 = vunpack.c.l.b16 %v1185
    %v1258 = vunpack.c.l.b16 %v1186
    %v1259 = vunpack.c.l.b16 %v1187
    %v1260 = vunpack.c.l.b16 %v1188
    %v1261 = vunpack.c.l.b16 %v1189
    %v1262 = vunpack.c.l.b16 %v1190
    %v1263 = vunpack.c.l.b16 %v1191
    %v1264 = vunpack.c.l.b16 %v1192
    %v1265 = vunpack.c.l.b16 %v1193
    %v1266 = vunpack.c.l.b16 %v1194
    %v1267 = vunpack.c.l.b16 %v1195
    %v1268 = vunpack.c.l.b16 %v1196
    %v1269 = vunpack.c.l.b16 %v1197
    %v1270 = vpack.c.b16 %v1239, %v1238
    %v1271 = vpack.c.b16 %v1241, %v1240
    %v1272 = vpack.c.b16 %v1243, %v1242
    %v1273 = vpack.c.b16 %v1245, %v1244
    %v1274 = vpack.c.b16 %v1247, %v1246
    %v1275 = vpack.c.b16 %v1249, %v1248
    %v1276 = vpack.c.b16 %v1251, %v1250
    %v1277 = vpack.c.b16 %v1253, %v1252
    %v1278 = vpack.c.b16 %v1255, %v1254
    %v1279 = vpack.c.b16 %v1257, %v1256
    %v1280 = vpack.c.b16 %v1259, %v1258
    %v1281 = vpack.c.b16 %v1261, %v1260
    %v1282 = vpack.c.b16 %v1263, %v1262
    %v1283 = vpack.c.b16 %v1265, %v1264
    %v1284 = vpack.c.b16 %v1267, %v1266
    %v1285 = vpack.c.b16 %v1269, %v1268
    %1302 = vmatprep.subr.bf16.mxu0 0
    %1303 = vmatpush1.bf16.msra.mxu0 %v1270
    %1304 = vmatprep.subr.bf16.mxu0 0
    %1305 = vmatpush1.bf16.msra.mxu0 %v1271
    %1306 = vmatprep.subr.bf16.mxu0 0
    %1307 = vmatpush1.bf16.msra.mxu0 %v1272
    %1308 = vmatprep.subr.bf16.mxu0 0
    %1309 = vmatpush1.bf16.msra.mxu0 %v1273
    %1310 = vmatprep.subr.bf16.mxu0 0
    %1311 = vmatpush1.bf16.msra.mxu0 %v1274
    %1312 = vmatprep.subr.bf16.mxu0 0
    %1313 = vmatpush1.bf16.msra.mxu0 %v1275
    %1314 = vmatprep.subr.bf16.mxu0 0
    %1315 = vmatpush1.bf16.msra.mxu0 %v1276
    %1316 = vmatprep.subr.bf16.mxu0 0
    %1317 = vmatpush1.bf16.msra.mxu0 %v1277
    %1318 = vmatprep.subr.bf16.mxu0 0
    %1319 = vmatpush1.bf16.msra.mxu0 %v1278
    %1320 = vmatprep.subr.bf16.mxu0 0
    %1321 = vmatpush1.bf16.msra.mxu0 %v1279
    %1322 = vmatprep.subr.bf16.mxu0 0
    %1323 = vmatpush1.bf16.msra.mxu0 %v1280
    %1324 = vmatprep.subr.bf16.mxu0 0
    %1325 = vmatpush1.bf16.msra.mxu0 %v1281
    %1326 = vmatprep.subr.bf16.mxu0 0
    %1327 = vmatpush1.bf16.msra.mxu0 %v1282
    %1328 = vmatprep.subr.bf16.mxu0 0
    %1329 = vmatpush1.bf16.msra.mxu0 %v1283
    %1330 = vmatprep.subr.bf16.mxu0 0
    %1331 = vmatpush1.bf16.msra.mxu0 %v1284
    %1332 = vmatprep.subr.bf16.mxu0 0
    %1333 = vmatpush1.bf16.msra.mxu0 %v1285
    %1334 = vmatprep.mubr.bf16.mxu0 %v1199
    %1335 = vmatmul.mubr.bf16.gmra.mrb[0].mxu0 %v1198
    %v1336 = vpop.f32.mrb[0].mxu0
    %v1337 = vadd.f32 %v1205, %v1336
    %v1338 = vpop.f32.mrb[0].mxu0
    %v1339 = vpop.f32.mrb[0].mxu0
    %v1340 = vadd.f32 %v1205, %v1339
    %v1341 = vpop.f32.mrb[0].mxu0
    %1342 = vdwg.mxu0
    %1343 = vst [vmem:[#allocation14] sm:$0xff] %v1337
    %1344 = vst [vmem:[#allocation14 + $0x8] sm:$0xff] %v1340
    %v1345 = vld [vmem:[#allocation10] sm:$0xff]
    %v1346 = vld [vmem:[#allocation10 + $0x8] sm:$0xff]
    %v1347 = vld [vmem:[#allocation10 + $0x10] sm:$0xff]
    %v1348 = vld [vmem:[#allocation10 + $0x18] sm:$0xff]
    %v1349 = vld [vmem:[#allocation10 + $0x20] sm:$0xff]
    %v1350 = vld [vmem:[#allocation10 + $0x28] sm:$0xff]
    %v1351 = vld [vmem:[#allocation10 + $0x30] sm:$0xff]
    %v1352 = vld [vmem:[#allocation10 + $0x38] sm:$0xff]
    %v1353 = vld [vmem:[#allocation10 + $0x40] sm:$0xff]
    %v1354 = vld [vmem:[#allocation10 + $0x48] sm:$0xff]
    %v1355 = vld [vmem:[#allocation10 + $0x50] sm:$0xff]
    %v1356 = vld [vmem:[#allocation10 + $0x58] sm:$0xff]
    %v1357 = vld [vmem:[#allocation10 + $0x60] sm:$0xff]
    %v1358 = vld [vmem:[#allocation10 + $0x68] sm:$0xff]
    %v1359 = vld [vmem:[#allocation10 + $0x70] sm:$0xff]
    %v1360 = vld [vmem:[#allocation10 + $0x78] sm:$0xff]
    %v1361 = vpack.c.bf16 %v1340, %v1337
    %v1362 = vld [vmem:[%s8] sm:$0x3]
    %v1363 = vunpack.c.l.bf16 %v1362
    %v1365 = vlaneseq
    %v1366 = vshrl.u32 %v1365, 7
    %v1367 = vsub.s32 0, %v1366
    %v1368 = vrot.slane %v1363, %v1367
    %v1369 = vlaneseq
    %v1370 = vshrl.u32 %v1369, 7
    %v1371 = vsub.s32 2, %v1370
    %v1372 = vrot.slane %v1363, %v1371
    %v1375 = vlaneseq
    %v1376 = vshrl.u32 %v1375, 7
    %v1377 = vsub.s32 0, %v1376
    %v1378 = vrot.slane %v1368, %v1377
    %v1379 = vlaneseq
    %v1380 = vshrl.u32 %v1379, 7
    %v1381 = vsub.s32 0, %v1380
    %v1382 = vrot.slane %v1372, %v1381
    %v1399 = vunpack.c.l.b16 %v1345
    %v1400 = vunpack.c.h.b16 %v1345
    %v1401 = vunpack.c.l.b16 %v1346
    %v1402 = vunpack.c.h.b16 %v1346
    %v1403 = vunpack.c.l.b16 %v1347
    %v1404 = vunpack.c.h.b16 %v1347
    %v1405 = vunpack.c.l.b16 %v1348
    %v1406 = vunpack.c.h.b16 %v1348
    %v1407 = vunpack.c.l.b16 %v1349
    %v1408 = vunpack.c.h.b16 %v1349
    %v1409 = vunpack.c.l.b16 %v1350
    %v1410 = vunpack.c.h.b16 %v1350
    %v1411 = vunpack.c.l.b16 %v1351
    %v1412 = vunpack.c.h.b16 %v1351
    %v1413 = vunpack.c.l.b16 %v1352
    %v1414 = vunpack.c.h.b16 %v1352
    %v1415 = vunpack.c.l.b16 %v1353
    %v1416 = vunpack.c.h.b16 %v1353
    %v1417 = vunpack.c.l.b16 %v1354
    %v1418 = vunpack.c.h.b16 %v1354
    %v1419 = vunpack.c.l.b16 %v1355
    %v1420 = vunpack.c.h.b16 %v1355
    %v1421 = vunpack.c.l.b16 %v1356
    %v1422 = vunpack.c.h.b16 %v1356
    %v1423 = vunpack.c.l.b16 %v1357
    %v1424 = vunpack.c.h.b16 %v1357
    %v1425 = vunpack.c.l.b16 %v1358
    %v1426 = vunpack.c.h.b16 %v1358
    %v1427 = vunpack.c.l.b16 %v1359
    %v1428 = vunpack.c.h.b16 %v1359
    %v1429 = vunpack.c.l.b16 %v1360
    %v1430 = vunpack.c.h.b16 %v1360
    %v1431 = vpack.c.b16 %v1401, %v1399
    %v1432 = vpack.c.b16 %v1402, %v1400
    %v1433 = vpack.c.b16 %v1405, %v1403
    %v1434 = vpack.c.b16 %v1406, %v1404
    %v1435 = vpack.c.b16 %v1409, %v1407
    %v1436 = vpack.c.b16 %v1410, %v1408
    %v1437 = vpack.c.b16 %v1413, %v1411
    %v1438 = vpack.c.b16 %v1414, %v1412
    %v1439 = vpack.c.b16 %v1417, %v1415
    %v1440 = vpack.c.b16 %v1418, %v1416
    %v1441 = vpack.c.b16 %v1421, %v1419
    %v1442 = vpack.c.b16 %v1422, %v1420
    %v1443 = vpack.c.b16 %v1425, %v1423
    %v1444 = vpack.c.b16 %v1426, %v1424
    %v1445 = vpack.c.b16 %v1429, %v1427
    %v1446 = vpack.c.b16 %v1430, %v1428
    %1463 = vmatprep.subr.bf16.mxu0 %v1432
    %1464 = vmatpush1.bf16.msra.mxu0 %v1431
    %1465 = vmatprep.subr.bf16.mxu0 %v1434
    %1466 = vmatpush1.bf16.msra.mxu0 %v1433
    %1467 = vmatprep.subr.bf16.mxu0 %v1436
    %1468 = vmatpush1.bf16.msra.mxu0 %v1435
    %1469 = vmatprep.subr.bf16.mxu0 %v1438
    %1470 = vmatpush1.bf16.msra.mxu0 %v1437
    %1471 = vmatprep.subr.bf16.mxu0 %v1440
    %1472 = vmatpush1.bf16.msra.mxu0 %v1439
    %1473 = vmatprep.subr.bf16.mxu0 %v1442
    %1474 = vmatpush1.bf16.msra.mxu0 %v1441
    %1475 = vmatprep.subr.bf16.mxu0 %v1444
    %1476 = vmatpush1.bf16.msra.mxu0 %v1443
    %1477 = vmatprep.subr.bf16.mxu0 %v1446
    %1478 = vmatpush1.bf16.msra.mxu0 %v1445
    %1479 = vmatprep.subr.bf16.mxu0 0
    %1480 = vmatpush1.bf16.msra.mxu0 0
    %1481 = vmatprep.subr.bf16.mxu0 0
    %1482 = vmatpush1.bf16.msra.mxu0 0
    %1483 = vmatprep.subr.bf16.mxu0 0
    %1484 = vmatpush1.bf16.msra.mxu0 0
    %1485 = vmatprep.subr.bf16.mxu0 0
    %1486 = vmatpush1.bf16.msra.mxu0 0
    %1487 = vmatprep.subr.bf16.mxu0 0
    %1488 = vmatpush1.bf16.msra.mxu0 0
    %1489 = vmatprep.subr.bf16.mxu0 0
    %1490 = vmatpush1.bf16.msra.mxu0 0
    %1491 = vmatprep.subr.bf16.mxu0 0
    %1492 = vmatpush1.bf16.msra.mxu0 0
    %1493 = vmatprep.subr.bf16.mxu0 0
    %1494 = vmatpush1.bf16.msra.mxu0 0
    %1495 = vmatprep.mubr.bf16.mxu0 0
    %1496 = vmatmul.mubr.bf16.gmra.mrb[0].mxu0 %v1361
    %v1497 = vpop.f32.mrb[0].mxu0
    %v1498 = vadd.f32 %v1378, %v1497
    %v1499 = vpop.f32.mrb[0].mxu0
    %v1500 = vadd.f32 %v1382, %v1499
    %v1501 = vpop.f32.mrb[0].mxu0
    %v1502 = vadd.f32 %v1378, %v1501
    %v1503 = vpop.f32.mrb[0].mxu0
    %v1504 = vadd.f32 %v1382, %v1503
    %1505 = vdwg.mxu0
    %v1506 = vmax.f32 %v1498, 0.0
    %v1507 = vmax.f32 %v1500, 0.0
    %v1508 = vmax.f32 %v1502, 0.0
    %v1509 = vmax.f32 %v1504, 0.0
    %v1510 = vld [vmem:[#allocation11] sm:$0xff]
    %v1511 = vld [vmem:[#allocation11 + $0x8] sm:$0xff]
    %v1512 = vld [vmem:[#allocation11 + $0x10] sm:$0xff]
    %v1513 = vld [vmem:[#allocation11 + $0x18] sm:$0xff]
    %v1514 = vld [vmem:[#allocation11 + $0x20] sm:$0xff]
    %v1515 = vld [vmem:[#allocation11 + $0x28] sm:$0xff]
    %v1516 = vld [vmem:[#allocation11 + $0x30] sm:$0xff]
    %v1517 = vld [vmem:[#allocation11 + $0x38] sm:$0xff]
    %v1518 = vld [vmem:[#allocation11 + $0x40] sm:$0xff]
    %v1519 = vld [vmem:[#allocation11 + $0x48] sm:$0xff]
    %v1520 = vld [vmem:[#allocation11 + $0x50] sm:$0xff]
    %v1521 = vld [vmem:[#allocation11 + $0x58] sm:$0xff]
    %v1522 = vld [vmem:[#allocation11 + $0x60] sm:$0xff]
    %v1523 = vld [vmem:[#allocation11 + $0x68] sm:$0xff]
    %v1524 = vld [vmem:[#allocation11 + $0x70] sm:$0xff]
    %v1525 = vld [vmem:[#allocation11 + $0x78] sm:$0xff]
    %v1526 = vld [vmem:[#allocation11 + $0x80] sm:$0xff]
    %v1527 = vld [vmem:[#allocation11 + $0x88] sm:$0xff]
    %v1528 = vld [vmem:[#allocation11 + $0x90] sm:$0xff]
    %v1529 = vld [vmem:[#allocation11 + $0x98] sm:$0xff]
    %v1530 = vld [vmem:[#allocation11 + $0xa0] sm:$0xff]
    %v1531 = vld [vmem:[#allocation11 + $0xa8] sm:$0xff]
    %v1532 = vld [vmem:[#allocation11 + $0xb0] sm:$0xff]
    %v1533 = vld [vmem:[#allocation11 + $0xb8] sm:$0xff]
    %v1534 = vld [vmem:[#allocation11 + $0xc0] sm:$0xff]
    %v1535 = vld [vmem:[#allocation11 + $0xc8] sm:$0xff]
    %v1536 = vld [vmem:[#allocation11 + $0xd0] sm:$0xff]
    %v1537 = vld [vmem:[#allocation11 + $0xd8] sm:$0xff]
    %v1538 = vld [vmem:[#allocation11 + $0xe0] sm:$0xff]
    %v1539 = vld [vmem:[#allocation11 + $0xe8] sm:$0xff]
    %v1540 = vld [vmem:[#allocation11 + $0xf0] sm:$0xff]
    %v1541 = vld [vmem:[#allocation11 + $0xf8] sm:$0xff]
    %v1542 = vld [vmem:[#allocation11 + $0x100] sm:$0xff]
    %v1543 = vld [vmem:[#allocation11 + $0x108] sm:$0xff]
    %v1544 = vld [vmem:[#allocation11 + $0x110] sm:$0xff]
    %v1545 = vld [vmem:[#allocation11 + $0x118] sm:$0xff]
    %v1546 = vld [vmem:[#allocation11 + $0x120] sm:$0xff]
    %v1547 = vld [vmem:[#allocation11 + $0x128] sm:$0xff]
    %v1548 = vld [vmem:[#allocation11 + $0x130] sm:$0xff]
    %v1549 = vld [vmem:[#allocation11 + $0x138] sm:$0xff]
    %v1550 = vld [vmem:[#allocation11 + $0x140] sm:$0xff]
    %v1551 = vld [vmem:[#allocation11 + $0x148] sm:$0xff]
    %v1552 = vld [vmem:[#allocation11 + $0x150] sm:$0xff]
    %v1553 = vld [vmem:[#allocation11 + $0x158] sm:$0xff]
    %v1554 = vld [vmem:[#allocation11 + $0x160] sm:$0xff]
    %v1555 = vld [vmem:[#allocation11 + $0x168] sm:$0xff]
    %v1556 = vld [vmem:[#allocation11 + $0x170] sm:$0xff]
    %v1557 = vld [vmem:[#allocation11 + $0x178] sm:$0xff]
    %v1558 = vld [vmem:[#allocation11 + $0x180] sm:$0xff]
    %v1559 = vld [vmem:[#allocation11 + $0x188] sm:$0xff]
    %v1560 = vld [vmem:[#allocation11 + $0x190] sm:$0xff]
    %v1561 = vld [vmem:[#allocation11 + $0x198] sm:$0xff]
    %v1562 = vld [vmem:[#allocation11 + $0x1a0] sm:$0xff]
    %v1563 = vld [vmem:[#allocation11 + $0x1a8] sm:$0xff]
    %v1564 = vld [vmem:[#allocation11 + $0x1b0] sm:$0xff]
    %v1565 = vld [vmem:[#allocation11 + $0x1b8] sm:$0xff]
    %v1566 = vld [vmem:[#allocation11 + $0x1c0] sm:$0xff]
    %v1567 = vld [vmem:[#allocation11 + $0x1c8] sm:$0xff]
    %v1568 = vld [vmem:[#allocation11 + $0x1d0] sm:$0xff]
    %v1569 = vld [vmem:[#allocation11 + $0x1d8] sm:$0xff]
    %v1570 = vld [vmem:[#allocation11 + $0x1e0] sm:$0xff]
    %v1571 = vld [vmem:[#allocation11 + $0x1e8] sm:$0xff]
    %v1572 = vld [vmem:[#allocation11 + $0x1f0] sm:$0xff]
    %v1573 = vld [vmem:[#allocation11 + $0x1f8] sm:$0xff]
    %v1574 = vpack.c.bf16 %v1508, %v1506
    %v1575 = vpack.c.bf16 %v1509, %v1507
    %v1576 = vld [vmem:[%s10] sm:$0xf]
    %v1577 = vunpack.c.l.bf16 %v1576
    %v1579 = vlaneseq
    %v1580 = vshrl.u32 %v1579, 7
    %v1581 = vsub.s32 0, %v1580
    %v1582 = vrot.slane %v1577, %v1581
    %v1583 = vlaneseq
    %v1584 = vshrl.u32 %v1583, 7
    %v1585 = vsub.s32 2, %v1584
    %v1586 = vrot.slane %v1577, %v1585
    %v1587 = vlaneseq
    %v1588 = vshrl.u32 %v1587, 7
    %v1589 = vsub.s32 4, %v1588
    %v1590 = vrot.slane %v1577, %v1589
    %v1591 = vlaneseq
    %v1592 = vshrl.u32 %v1591, 7
    %v1593 = vsub.s32 6, %v1592
    %v1594 = vrot.slane %v1577, %v1593
    %v1599 = vlaneseq
    %v1600 = vshrl.u32 %v1599, 7
    %v1601 = vsub.s32 0, %v1600
    %v1602 = vrot.slane %v1582, %v1601
    %v1603 = vlaneseq
    %v1604 = vshrl.u32 %v1603, 7
    %v1605 = vsub.s32 0, %v1604
    %v1606 = vrot.slane %v1586, %v1605
    %v1607 = vlaneseq
    %v1608 = vshrl.u32 %v1607, 7
    %v1609 = vsub.s32 0, %v1608
    %v1610 = vrot.slane %v1590, %v1609
    %v1611 = vlaneseq
    %v1612 = vshrl.u32 %v1611, 7
    %v1613 = vsub.s32 0, %v1612
    %v1614 = vrot.slane %v1594, %v1613
    %v1679 = vunpack.c.l.b16 %v1510
    %v1680 = vunpack.c.h.b16 %v1510
    %v1681 = vunpack.c.l.b16 %v1511
    %v1682 = vunpack.c.h.b16 %v1511
    %v1683 = vunpack.c.l.b16 %v1512
    %v1684 = vunpack.c.h.b16 %v1512
    %v1685 = vunpack.c.l.b16 %v1513
    %v1686 = vunpack.c.h.b16 %v1513
    %v1687 = vunpack.c.l.b16 %v1514
    %v1688 = vunpack.c.h.b16 %v1514
    %v1689 = vunpack.c.l.b16 %v1515
    %v1690 = vunpack.c.h.b16 %v1515
    %v1691 = vunpack.c.l.b16 %v1516
    %v1692 = vunpack.c.h.b16 %v1516
    %v1693 = vunpack.c.l.b16 %v1517
    %v1694 = vunpack.c.h.b16 %v1517
    %v1695 = vunpack.c.l.b16 %v1518
    %v1696 = vunpack.c.h.b16 %v1518
    %v1697 = vunpack.c.l.b16 %v1519
    %v1698 = vunpack.c.h.b16 %v1519
    %v1699 = vunpack.c.l.b16 %v1520
    %v1700 = vunpack.c.h.b16 %v1520
    %v1701 = vunpack.c.l.b16 %v1521
    %v1702 = vunpack.c.h.b16 %v1521
    %v1703 = vunpack.c.l.b16 %v1522
    %v1704 = vunpack.c.h.b16 %v1522
    %v1705 = vunpack.c.l.b16 %v1523
    %v1706 = vunpack.c.h.b16 %v1523
    %v1707 = vunpack.c.l.b16 %v1524
    %v1708 = vunpack.c.h.b16 %v1524
    %v1709 = vunpack.c.l.b16 %v1525
    %v1710 = vunpack.c.h.b16 %v1525
    %v1711 = vunpack.c.l.b16 %v1526
    %v1712 = vunpack.c.h.b16 %v1526
    %v1713 = vunpack.c.l.b16 %v1527
    %v1714 = vunpack.c.h.b16 %v1527
    %v1715 = vunpack.c.l.b16 %v1528
    %v1716 = vunpack.c.h.b16 %v1528
    %v1717 = vunpack.c.l.b16 %v1529
    %v1718 = vunpack.c.h.b16 %v1529
    %v1719 = vunpack.c.l.b16 %v1530
    %v1720 = vunpack.c.h.b16 %v1530
    %v1721 = vunpack.c.l.b16 %v1531
    %v1722 = vunpack.c.h.b16 %v1531
    %v1723 = vunpack.c.l.b16 %v1532
    %v1724 = vunpack.c.h.b16 %v1532
    %v1725 = vunpack.c.l.b16 %v1533
    %v1726 = vunpack.c.h.b16 %v1533
    %v1727 = vunpack.c.l.b16 %v1534
    %v1728 = vunpack.c.h.b16 %v1534
    %v1729 = vunpack.c.l.b16 %v1535
    %v1730 = vunpack.c.h.b16 %v1535
    %v1731 = vunpack.c.l.b16 %v1536
    %v1732 = vunpack.c.h.b16 %v1536
    %v1733 = vunpack.c.l.b16 %v1537
    %v1734 = vunpack.c.h.b16 %v1537
    %v1735 = vunpack.c.l.b16 %v1538
    %v1736 = vunpack.c.h.b16 %v1538
    %v1737 = vunpack.c.l.b16 %v1539
    %v1738 = vunpack.c.h.b16 %v1539
    %v1739 = vunpack.c.l.b16 %v1540
    %v1740 = vunpack.c.h.b16 %v1540
    %v1741 = vunpack.c.l.b16 %v1541
    %v1742 = vunpack.c.h.b16 %v1541
    %v1743 = vunpack.c.l.b16 %v1542
    %v1744 = vunpack.c.h.b16 %v1542
    %v1745 = vunpack.c.l.b16 %v1543
    %v1746 = vunpack.c.h.b16 %v1543
    %v1747 = vunpack.c.l.b16 %v1544
    %v1748 = vunpack.c.h.b16 %v1544
    %v1749 = vunpack.c.l.b16 %v1545
    %v1750 = vunpack.c.h.b16 %v1545
    %v1751 = vunpack.c.l.b16 %v1546
    %v1752 = vunpack.c.h.b16 %v1546
    %v1753 = vunpack.c.l.b16 %v1547
    %v1754 = vunpack.c.h.b16 %v1547
    %v1755 = vunpack.c.l.b16 %v1548
    %v1756 = vunpack.c.h.b16 %v1548
    %v1757 = vunpack.c.l.b16 %v1549
    %v1758 = vunpack.c.h.b16 %v1549
    %v1759 = vunpack.c.l.b16 %v1550
    %v1760 = vunpack.c.h.b16 %v1550
    %v1761 = vunpack.c.l.b16 %v1551
    %v1762 = vunpack.c.h.b16 %v1551
    %v1763 = vunpack.c.l.b16 %v1552
    %v1764 = vunpack.c.h.b16 %v1552
    %v1765 = vunpack.c.l.b16 %v1553
    %v1766 = vunpack.c.h.b16 %v1553
    %v1767 = vunpack.c.l.b16 %v1554
    %v1768 = vunpack.c.h.b16 %v1554
    %v1769 = vunpack.c.l.b16 %v1555
    %v1770 = vunpack.c.h.b16 %v1555
    %v1771 = vunpack.c.l.b16 %v1556
    %v1772 = vunpack.c.h.b16 %v1556
    %v1773 = vunpack.c.l.b16 %v1557
    %v1774 = vunpack.c.h.b16 %v1557
    %v1775 = vunpack.c.l.b16 %v1558
    %v1776 = vunpack.c.h.b16 %v1558
    %v1777 = vunpack.c.l.b16 %v1559
    %v1778 = vunpack.c.h.b16 %v1559
    %v1779 = vunpack.c.l.b16 %v1560
    %v1780 = vunpack.c.h.b16 %v1560
    %v1781 = vunpack.c.l.b16 %v1561
    %v1782 = vunpack.c.h.b16 %v1561
    %v1783 = vunpack.c.l.b16 %v1562
    %v1784 = vunpack.c.h.b16 %v1562
    %v1785 = vunpack.c.l.b16 %v1563
    %v1786 = vunpack.c.h.b16 %v1563
    %v1787 = vunpack.c.l.b16 %v1564
    %v1788 = vunpack.c.h.b16 %v1564
    %v1789 = vunpack.c.l.b16 %v1565
    %v1790 = vunpack.c.h.b16 %v1565
    %v1791 = vunpack.c.l.b16 %v1566
    %v1792 = vunpack.c.h.b16 %v1566
    %v1793 = vunpack.c.l.b16 %v1567
    %v1794 = vunpack.c.h.b16 %v1567
    %v1795 = vunpack.c.l.b16 %v1568
    %v1796 = vunpack.c.h.b16 %v1568
    %v1797 = vunpack.c.l.b16 %v1569
    %v1798 = vunpack.c.h.b16 %v1569
    %v1799 = vunpack.c.l.b16 %v1570
    %v1800 = vunpack.c.h.b16 %v1570
    %v1801 = vunpack.c.l.b16 %v1571
    %v1802 = vunpack.c.h.b16 %v1571
    %v1803 = vunpack.c.l.b16 %v1572
    %v1804 = vunpack.c.h.b16 %v1572
    %v1805 = vunpack.c.l.b16 %v1573
    %v1806 = vunpack.c.h.b16 %v1573
    %v1807 = vpack.c.b16 %v1683, %v1679
    %v1808 = vpack.c.b16 %v1684, %v1680
    %v1809 = vpack.c.b16 %v1685, %v1681
    %v1810 = vpack.c.b16 %v1686, %v1682
    %v1811 = vpack.c.b16 %v1691, %v1687
    %v1812 = vpack.c.b16 %v1692, %v1688
    %v1813 = vpack.c.b16 %v1693, %v1689
    %v1814 = vpack.c.b16 %v1694, %v1690
    %v1815 = vpack.c.b16 %v1699, %v1695
    %v1816 = vpack.c.b16 %v1700, %v1696
    %v1817 = vpack.c.b16 %v1701, %v1697
    %v1818 = vpack.c.b16 %v1702, %v1698
    %v1819 = vpack.c.b16 %v1707, %v1703
    %v1820 = vpack.c.b16 %v1708, %v1704
    %v1821 = vpack.c.b16 %v1709, %v1705
    %v1822 = vpack.c.b16 %v1710, %v1706
    %v1823 = vpack.c.b16 %v1715, %v1711
    %v1824 = vpack.c.b16 %v1716, %v1712
    %v1825 = vpack.c.b16 %v1717, %v1713
    %v1826 = vpack.c.b16 %v1718, %v1714
    %v1827 = vpack.c.b16 %v1723, %v1719
    %v1828 = vpack.c.b16 %v1724, %v1720
    %v1829 = vpack.c.b16 %v1725, %v1721
    %v1830 = vpack.c.b16 %v1726, %v1722
    %v1831 = vpack.c.b16 %v1731, %v1727
    %v1832 = vpack.c.b16 %v1732, %v1728
    %v1833 = vpack.c.b16 %v1733, %v1729
    %v1834 = vpack.c.b16 %v1734, %v1730
    %v1835 = vpack.c.b16 %v1739, %v1735
    %v1836 = vpack.c.b16 %v1740, %v1736
    %v1837 = vpack.c.b16 %v1741, %v1737
    %v1838 = vpack.c.b16 %v1742, %v1738
    %v1839 = vpack.c.b16 %v1747, %v1743
    %v1840 = vpack.c.b16 %v1748, %v1744
    %v1841 = vpack.c.b16 %v1749, %v1745
    %v1842 = vpack.c.b16 %v1750, %v1746
    %v1843 = vpack.c.b16 %v1755, %v1751
    %v1844 = vpack.c.b16 %v1756, %v1752
    %v1845 = vpack.c.b16 %v1757, %v1753
    %v1846 = vpack.c.b16 %v1758, %v1754
    %v1847 = vpack.c.b16 %v1763, %v1759
    %v1848 = vpack.c.b16 %v1764, %v1760
    %v1849 = vpack.c.b16 %v1765, %v1761
    %v1850 = vpack.c.b16 %v1766, %v1762
    %v1851 = vpack.c.b16 %v1771, %v1767
    %v1852 = vpack.c.b16 %v1772, %v1768
    %v1853 = vpack.c.b16 %v1773, %v1769
    %v1854 = vpack.c.b16 %v1774, %v1770
    %v1855 = vpack.c.b16 %v1779, %v1775
    %v1856 = vpack.c.b16 %v1780, %v1776
    %v1857 = vpack.c.b16 %v1781, %v1777
    %v1858 = vpack.c.b16 %v1782, %v1778
    %v1859 = vpack.c.b16 %v1787, %v1783
    %v1860 = vpack.c.b16 %v1788, %v1784
    %v1861 = vpack.c.b16 %v1789, %v1785
    %v1862 = vpack.c.b16 %v1790, %v1786
    %v1863 = vpack.c.b16 %v1795, %v1791
    %v1864 = vpack.c.b16 %v1796, %v1792
    %v1865 = vpack.c.b16 %v1797, %v1793
    %v1866 = vpack.c.b16 %v1798, %v1794
    %v1867 = vpack.c.b16 %v1803, %v1799
    %v1868 = vpack.c.b16 %v1804, %v1800
    %v1869 = vpack.c.b16 %v1805, %v1801
    %v1870 = vpack.c.b16 %v1806, %v1802
    %1935 = vmatprep.subr.bf16.mxu0 %v1808
    %1936 = vmatpush1.bf16.msra.mxu0 %v1807
    %1937 = vmatprep.subr.bf16.mxu0 %v1812
    %1938 = vmatpush1.bf16.msra.mxu0 %v1811
    %1939 = vmatprep.subr.bf16.mxu0 %v1816
    %1940 = vmatpush1.bf16.msra.mxu0 %v1815
    %1941 = vmatprep.subr.bf16.mxu0 %v1820
    %1942 = vmatpush1.bf16.msra.mxu0 %v1819
    %1943 = vmatprep.subr.bf16.mxu0 %v1824
    %1944 = vmatpush1.bf16.msra.mxu0 %v1823
    %1945 = vmatprep.subr.bf16.mxu0 %v1828
    %1946 = vmatpush1.bf16.msra.mxu0 %v1827
    %1947 = vmatprep.subr.bf16.mxu0 %v1832
    %1948 = vmatpush1.bf16.msra.mxu0 %v1831
    %1949 = vmatprep.subr.bf16.mxu0 %v1836
    %1950 = vmatpush1.bf16.msra.mxu0 %v1835
    %1951 = vmatprep.subr.bf16.mxu0 %v1840
    %1952 = vmatpush1.bf16.msra.mxu0 %v1839
    %1953 = vmatprep.subr.bf16.mxu0 %v1844
    %1954 = vmatpush1.bf16.msra.mxu0 %v1843
    %1955 = vmatprep.subr.bf16.mxu0 %v1848
    %1956 = vmatpush1.bf16.msra.mxu0 %v1847
    %1957 = vmatprep.subr.bf16.mxu0 %v1852
    %1958 = vmatpush1.bf16.msra.mxu0 %v1851
    %1959 = vmatprep.subr.bf16.mxu0 %v1856
    %1960 = vmatpush1.bf16.msra.mxu0 %v1855
    %1961 = vmatprep.subr.bf16.mxu0 %v1860
    %1962 = vmatpush1.bf16.msra.mxu0 %v1859
    %1963 = vmatprep.subr.bf16.mxu0 %v1864
    %1964 = vmatpush1.bf16.msra.mxu0 %v1863
    %1965 = vmatprep.subr.bf16.mxu0 %v1868
    %1966 = vmatpush1.bf16.msra.mxu0 %v1867
    %1967 = vmatprep.mubr.bf16.mxu0 %v1575
    %1968 = vmatmul.mubr.bf16.gmra.mrb[0].mxu0 %v1574
    %v1969 = vpop.f32.mrb[0].mxu0
    %v1970 = vadd.f32 %v1602, %v1969
    %v1971 = vpop.f32.mrb[0].mxu0
    %v1972 = vadd.f32 %v1606, %v1971
    %v1973 = vpop.f32.mrb[0].mxu0
    %v1974 = vadd.f32 %v1602, %v1973
    %v1975 = vpop.f32.mrb[0].mxu0
    %v1976 = vadd.f32 %v1606, %v1975
    %1977 = vdwg.mxu0
    %1978 = vmatprep.subr.bf16.mxu0 %v1810
    %1979 = vmatpush1.bf16.msra.mxu0 %v1809
    %1980 = vmatprep.subr.bf16.mxu0 %v1814
    %1981 = vmatpush1.bf16.msra.mxu0 %v1813
    %1982 = vmatprep.subr.bf16.mxu0 %v1818
    %1983 = vmatpush1.bf16.msra.mxu0 %v1817
    %1984 = vmatprep.subr.bf16.mxu0 %v1822
    %1985 = vmatpush1.bf16.msra.mxu0 %v1821
    %1986 = vmatprep.subr.bf16.mxu0 %v1826
    %1987 = vmatpush1.bf16.msra.mxu0 %v1825
    %1988 = vmatprep.subr.bf16.mxu0 %v1830
    %1989 = vmatpush1.bf16.msra.mxu0 %v1829
    %1990 = vmatprep.subr.bf16.mxu0 %v1834
    %1991 = vmatpush1.bf16.msra.mxu0 %v1833
    %1992 = vmatprep.subr.bf16.mxu0 %v1838
    %1993 = vmatpush1.bf16.msra.mxu0 %v1837
    %1994 = vmatprep.subr.bf16.mxu0 %v1842
    %1995 = vmatpush1.bf16.msra.mxu0 %v1841
    %1996 = vmatprep.subr.bf16.mxu0 %v1846
    %1997 = vmatpush1.bf16.msra.mxu0 %v1845
    %1998 = vmatprep.subr.bf16.mxu0 %v1850
    %1999 = vmatpush1.bf16.msra.mxu0 %v1849
    %2000 = vmatprep.subr.bf16.mxu0 %v1854
    %2001 = vmatpush1.bf16.msra.mxu0 %v1853
    %2002 = vmatprep.subr.bf16.mxu0 %v1858
    %2003 = vmatpush1.bf16.msra.mxu0 %v1857
    %2004 = vmatprep.subr.bf16.mxu0 %v1862
    %2005 = vmatpush1.bf16.msra.mxu0 %v1861
    %2006 = vmatprep.subr.bf16.mxu0 %v1866
    %2007 = vmatpush1.bf16.msra.mxu0 %v1865
    %2008 = vmatprep.subr.bf16.mxu0 %v1870
    %2009 = vmatpush1.bf16.msra.mxu0 %v1869
    %2010 = vmatprep.mubr.bf16.mxu0 %v1575
    %2011 = vmatmul.mubr.bf16.gmra.mrb[0].mxu0 %v1574
    %v2012 = vpop.f32.mrb[0].mxu0
    %v2013 = vadd.f32 %v1610, %v2012
    %v2014 = vpop.f32.mrb[0].mxu0
    %v2015 = vadd.f32 %v1614, %v2014
    %v2016 = vpop.f32.mrb[0].mxu0
    %v2017 = vadd.f32 %v1610, %v2016
    %v2018 = vpop.f32.mrb[0].mxu0
    %v2019 = vadd.f32 %v1614, %v2018
    %2020 = vdwg.mxu0
    %v2021 = vmax.f32 %v1970, 0.0
    %v2022 = vmax.f32 %v1972, 0.0
    %v2023 = vmax.f32 %v2013, 0.0
    %v2024 = vmax.f32 %v2015, 0.0
    %v2025 = vmax.f32 %v1974, 0.0
    %v2026 = vmax.f32 %v1976, 0.0
    %v2027 = vmax.f32 %v2017, 0.0
    %v2028 = vmax.f32 %v2019, 0.0
    %v2029 = vld [vmem:[#allocation13] sm:$0xff]
    %v2030 = vld [vmem:[#allocation13 + $0x8] sm:$0xff]
    %v2031 = vld [vmem:[#allocation13 + $0x10] sm:$0xff]
    %v2032 = vld [vmem:[#allocation13 + $0x18] sm:$0xff]
    %v2033 = vld [vmem:[#allocation13 + $0x20] sm:$0xff]
    %v2034 = vld [vmem:[#allocation13 + $0x28] sm:$0xff]
    %v2035 = vld [vmem:[#allocation13 + $0x30] sm:$0xff]
    %v2036 = vld [vmem:[#allocation13 + $0x38] sm:$0xff]
    %v2037 = vld [vmem:[#allocation13 + $0x40] sm:$0xff]
    %v2038 = vld [vmem:[#allocation13 + $0x48] sm:$0xff]
    %v2039 = vld [vmem:[#allocation13 + $0x50] sm:$0xff]
    %v2040 = vld [vmem:[#allocation13 + $0x58] sm:$0xff]
    %v2041 = vld [vmem:[#allocation13 + $0x60] sm:$0xff]
    %v2042 = vld [vmem:[#allocation13 + $0x68] sm:$0xff]
    %v2043 = vld [vmem:[#allocation13 + $0x70] sm:$0xff]
    %v2044 = vld [vmem:[#allocation13 + $0x78] sm:$0xff]
    %v2045 = vld [vmem:[#allocation13 + $0x80] sm:$0xff]
    %v2046 = vld [vmem:[#allocation13 + $0x88] sm:$0xff]
    %v2047 = vld [vmem:[#allocation13 + $0x90] sm:$0xff]
    %v2048 = vld [vmem:[#allocation13 + $0x98] sm:$0xff]
    %v2049 = vld [vmem:[#allocation13 + $0xa0] sm:$0xff]
    %v2050 = vld [vmem:[#allocation13 + $0xa8] sm:$0xff]
    %v2051 = vld [vmem:[#allocation13 + $0xb0] sm:$0xff]
    %v2052 = vld [vmem:[#allocation13 + $0xb8] sm:$0xff]
    %v2053 = vld [vmem:[#allocation13 + $0xc0] sm:$0xff]
    %v2054 = vld [vmem:[#allocation13 + $0xc8] sm:$0xff]
    %v2055 = vld [vmem:[#allocation13 + $0xd0] sm:$0xff]
    %v2056 = vld [vmem:[#allocation13 + $0xd8] sm:$0xff]
    %v2057 = vld [vmem:[#allocation13 + $0xe0] sm:$0xff]
    %v2058 = vld [vmem:[#allocation13 + $0xe8] sm:$0xff]
    %v2059 = vld [vmem:[#allocation13 + $0xf0] sm:$0xff]
    %v2060 = vld [vmem:[#allocation13 + $0xf8] sm:$0xff]
    %v2061 = vld [vmem:[#allocation13 + $0x100] sm:$0xff]
    %v2062 = vld [vmem:[#allocation13 + $0x108] sm:$0xff]
    %v2063 = vld [vmem:[#allocation13 + $0x110] sm:$0xff]
    %v2064 = vld [vmem:[#allocation13 + $0x118] sm:$0xff]
    %v2065 = vld [vmem:[#allocation13 + $0x120] sm:$0xff]
    %v2066 = vld [vmem:[#allocation13 + $0x128] sm:$0xff]
    %v2067 = vld [vmem:[#allocation13 + $0x130] sm:$0xff]
    %v2068 = vld [vmem:[#allocation13 + $0x138] sm:$0xff]
    %v2069 = vld [vmem:[#allocation13 + $0x140] sm:$0xff]
    %v2070 = vld [vmem:[#allocation13 + $0x148] sm:$0xff]
    %v2071 = vld [vmem:[#allocation13 + $0x150] sm:$0xff]
    %v2072 = vld [vmem:[#allocation13 + $0x158] sm:$0xff]
    %v2073 = vld [vmem:[#allocation13 + $0x160] sm:$0xff]
    %v2074 = vld [vmem:[#allocation13 + $0x168] sm:$0xff]
    %v2075 = vld [vmem:[#allocation13 + $0x170] sm:$0xff]
    %v2076 = vld [vmem:[#allocation13 + $0x178] sm:$0xff]
    %v2077 = vld [vmem:[#allocation13 + $0x180] sm:$0xff]
    %v2078 = vld [vmem:[#allocation13 + $0x188] sm:$0xff]
    %v2079 = vld [vmem:[#allocation13 + $0x190] sm:$0xff]
    %v2080 = vld [vmem:[#allocation13 + $0x198] sm:$0xff]
    %v2081 = vld [vmem:[#allocation13 + $0x1a0] sm:$0xff]
    %v2082 = vld [vmem:[#allocation13 + $0x1a8] sm:$0xff]
    %v2083 = vld [vmem:[#allocation13 + $0x1b0] sm:$0xff]
    %v2084 = vld [vmem:[#allocation13 + $0x1b8] sm:$0xff]
    %v2085 = vld [vmem:[#allocation13 + $0x1c0] sm:$0xff]
    %v2086 = vld [vmem:[#allocation13 + $0x1c8] sm:$0xff]
    %v2087 = vld [vmem:[#allocation13 + $0x1d0] sm:$0xff]
    %v2088 = vld [vmem:[#allocation13 + $0x1d8] sm:$0xff]
    %v2089 = vld [vmem:[#allocation13 + $0x1e0] sm:$0xff]
    %v2090 = vld [vmem:[#allocation13 + $0x1e8] sm:$0xff]
    %v2091 = vld [vmem:[#allocation13 + $0x1f0] sm:$0xff]
    %v2092 = vld [vmem:[#allocation13 + $0x1f8] sm:$0xff]
    %v2093 = vpack.c.bf16 %v2025, %v2021
    %v2094 = vpack.c.bf16 %v2026, %v2022
    %v2095 = vpack.c.bf16 %v2027, %v2023
    %v2096 = vpack.c.bf16 %v2028, %v2024
    %v2097 = vld [vmem:[%s12] sm:$0x3]
    %v2098 = vunpack.c.l.bf16 %v2097
    %v2100 = vlaneseq
    %v2101 = vshrl.u32 %v2100, 7
    %v2102 = vsub.s32 0, %v2101
    %v2103 = vrot.slane %v2098, %v2102
    %v2104 = vlaneseq
    %v2105 = vshrl.u32 %v2104, 7
    %v2106 = vsub.s32 2, %v2105
    %v2107 = vrot.slane %v2098, %v2106
    %v2110 = vlaneseq
    %v2111 = vshrl.u32 %v2110, 7
    %v2112 = vsub.s32 0, %v2111
    %v2113 = vrot.slane %v2103, %v2112
    %v2114 = vlaneseq
    %v2115 = vshrl.u32 %v2114, 7
    %v2116 = vsub.s32 0, %v2115
    %v2117 = vrot.slane %v2107, %v2116
    %v2182 = vunpack.c.l.b16 %v2029
    %v2183 = vunpack.c.h.b16 %v2029
    %v2184 = vunpack.c.l.b16 %v2030
    %v2185 = vunpack.c.h.b16 %v2030
    %v2186 = vunpack.c.l.b16 %v2031
    %v2187 = vunpack.c.h.b16 %v2031
    %v2188 = vunpack.c.l.b16 %v2032
    %v2189 = vunpack.c.h.b16 %v2032
    %v2190 = vunpack.c.l.b16 %v2033
    %v2191 = vunpack.c.h.b16 %v2033
    %v2192 = vunpack.c.l.b16 %v2034
    %v2193 = vunpack.c.h.b16 %v2034
    %v2194 = vunpack.c.l.b16 %v2035
    %v2195 = vunpack.c.h.b16 %v2035
    %v2196 = vunpack.c.l.b16 %v2036
    %v2197 = vunpack.c.h.b16 %v2036
    %v2198 = vunpack.c.l.b16 %v2037
    %v2199 = vunpack.c.h.b16 %v2037
    %v2200 = vunpack.c.l.b16 %v2038
    %v2201 = vunpack.c.h.b16 %v2038
    %v2202 = vunpack.c.l.b16 %v2039
    %v2203 = vunpack.c.h.b16 %v2039
    %v2204 = vunpack.c.l.b16 %v2040
    %v2205 = vunpack.c.h.b16 %v2040
    %v2206 = vunpack.c.l.b16 %v2041
    %v2207 = vunpack.c.h.b16 %v2041
    %v2208 = vunpack.c.l.b16 %v2042
    %v2209 = vunpack.c.h.b16 %v2042
    %v2210 = vunpack.c.l.b16 %v2043
    %v2211 = vunpack.c.h.b16 %v2043
    %v2212 = vunpack.c.l.b16 %v2044
    %v2213 = vunpack.c.h.b16 %v2044
    %v2214 = vunpack.c.l.b16 %v2045
    %v2215 = vunpack.c.h.b16 %v2045
    %v2216 = vunpack.c.l.b16 %v2046
    %v2217 = vunpack.c.h.b16 %v2046
    %v2218 = vunpack.c.l.b16 %v2047
    %v2219 = vunpack.c.h.b16 %v2047
    %v2220 = vunpack.c.l.b16 %v2048
    %v2221 = vunpack.c.h.b16 %v2048
    %v2222 = vunpack.c.l.b16 %v2049
    %v2223 = vunpack.c.h.b16 %v2049
    %v2224 = vunpack.c.l.b16 %v2050
    %v2225 = vunpack.c.h.b16 %v2050
    %v2226 = vunpack.c.l.b16 %v2051
    %v2227 = vunpack.c.h.b16 %v2051
    %v2228 = vunpack.c.l.b16 %v2052
    %v2229 = vunpack.c.h.b16 %v2052
    %v2230 = vunpack.c.l.b16 %v2053
    %v2231 = vunpack.c.h.b16 %v2053
    %v2232 = vunpack.c.l.b16 %v2054
    %v2233 = vunpack.c.h.b16 %v2054
    %v2234 = vunpack.c.l.b16 %v2055
    %v2235 = vunpack.c.h.b16 %v2055
    %v2236 = vunpack.c.l.b16 %v2056
    %v2237 = vunpack.c.h.b16 %v2056
    %v2238 = vunpack.c.l.b16 %v2057
    %v2239 = vunpack.c.h.b16 %v2057
    %v2240 = vunpack.c.l.b16 %v2058
    %v2241 = vunpack.c.h.b16 %v2058
    %v2242 = vunpack.c.l.b16 %v2059
    %v2243 = vunpack.c.h.b16 %v2059
    %v2244 = vunpack.c.l.b16 %v2060
    %v2245 = vunpack.c.h.b16 %v2060
    %v2246 = vunpack.c.l.b16 %v2061
    %v2247 = vunpack.c.h.b16 %v2061
    %v2248 = vunpack.c.l.b16 %v2062
    %v2249 = vunpack.c.h.b16 %v2062
    %v2250 = vunpack.c.l.b16 %v2063
    %v2251 = vunpack.c.h.b16 %v2063
    %v2252 = vunpack.c.l.b16 %v2064
    %v2253 = vunpack.c.h.b16 %v2064
    %v2254 = vunpack.c.l.b16 %v2065
    %v2255 = vunpack.c.h.b16 %v2065
    %v2256 = vunpack.c.l.b16 %v2066
    %v2257 = vunpack.c.h.b16 %v2066
    %v2258 = vunpack.c.l.b16 %v2067
    %v2259 = vunpack.c.h.b16 %v2067
    %v2260 = vunpack.c.l.b16 %v2068
    %v2261 = vunpack.c.h.b16 %v2068
    %v2262 = vunpack.c.l.b16 %v2069
    %v2263 = vunpack.c.h.b16 %v2069
    %v2264 = vunpack.c.l.b16 %v2070
    %v2265 = vunpack.c.h.b16 %v2070
    %v2266 = vunpack.c.l.b16 %v2071
    %v2267 = vunpack.c.h.b16 %v2071
    %v2268 = vunpack.c.l.b16 %v2072
    %v2269 = vunpack.c.h.b16 %v2072
    %v2270 = vunpack.c.l.b16 %v2073
    %v2271 = vunpack.c.h.b16 %v2073
    %v2272 = vunpack.c.l.b16 %v2074
    %v2273 = vunpack.c.h.b16 %v2074
    %v2274 = vunpack.c.l.b16 %v2075
    %v2275 = vunpack.c.h.b16 %v2075
    %v2276 = vunpack.c.l.b16 %v2076
    %v2277 = vunpack.c.h.b16 %v2076
    %v2278 = vunpack.c.l.b16 %v2077
    %v2279 = vunpack.c.h.b16 %v2077
    %v2280 = vunpack.c.l.b16 %v2078
    %v2281 = vunpack.c.h.b16 %v2078
    %v2282 = vunpack.c.l.b16 %v2079
    %v2283 = vunpack.c.h.b16 %v2079
    %v2284 = vunpack.c.l.b16 %v2080
    %v2285 = vunpack.c.h.b16 %v2080
    %v2286 = vunpack.c.l.b16 %v2081
    %v2287 = vunpack.c.h.b16 %v2081
    %v2288 = vunpack.c.l.b16 %v2082
    %v2289 = vunpack.c.h.b16 %v2082
    %v2290 = vunpack.c.l.b16 %v2083
    %v2291 = vunpack.c.h.b16 %v2083
    %v2292 = vunpack.c.l.b16 %v2084
    %v2293 = vunpack.c.h.b16 %v2084
    %v2294 = vunpack.c.l.b16 %v2085
    %v2295 = vunpack.c.h.b16 %v2085
    %v2296 = vunpack.c.l.b16 %v2086
    %v2297 = vunpack.c.h.b16 %v2086
    %v2298 = vunpack.c.l.b16 %v2087
    %v2299 = vunpack.c.h.b16 %v2087
    %v2300 = vunpack.c.l.b16 %v2088
    %v2301 = vunpack.c.h.b16 %v2088
    %v2302 = vunpack.c.l.b16 %v2089
    %v2303 = vunpack.c.h.b16 %v2089
    %v2304 = vunpack.c.l.b16 %v2090
    %v2305 = vunpack.c.h.b16 %v2090
    %v2306 = vunpack.c.l.b16 %v2091
    %v2307 = vunpack.c.h.b16 %v2091
    %v2308 = vunpack.c.l.b16 %v2092
    %v2309 = vunpack.c.h.b16 %v2092
    %v2310 = vpack.c.b16 %v2184, %v2182
    %v2311 = vpack.c.b16 %v2185, %v2183
    %v2312 = vpack.c.b16 %v2188, %v2186
    %v2313 = vpack.c.b16 %v2189, %v2187
    %v2314 = vpack.c.b16 %v2192, %v2190
    %v2315 = vpack.c.b16 %v2193, %v2191
    %v2316 = vpack.c.b16 %v2196, %v2194
    %v2317 = vpack.c.b16 %v2197, %v2195
    %v2318 = vpack.c.b16 %v2200, %v2198
    %v2319 = vpack.c.b16 %v2201, %v2199
    %v2320 = vpack.c.b16 %v2204, %v2202
    %v2321 = vpack.c.b16 %v2205, %v2203
    %v2322 = vpack.c.b16 %v2208, %v2206
    %v2323 = vpack.c.b16 %v2209, %v2207
    %v2324 = vpack.c.b16 %v2212, %v2210
    %v2325 = vpack.c.b16 %v2213, %v2211
    %v2326 = vpack.c.b16 %v2216, %v2214
    %v2327 = vpack.c.b16 %v2217, %v2215
    %v2328 = vpack.c.b16 %v2220, %v2218
    %v2329 = vpack.c.b16 %v2221, %v2219
    %v2330 = vpack.c.b16 %v2224, %v2222
    %v2331 = vpack.c.b16 %v2225, %v2223
    %v2332 = vpack.c.b16 %v2228, %v2226
    %v2333 = vpack.c.b16 %v2229, %v2227
    %v2334 = vpack.c.b16 %v2232, %v2230
    %v2335 = vpack.c.b16 %v2233, %v2231
    %v2336 = vpack.c.b16 %v2236, %v2234
    %v2337 = vpack.c.b16 %v2237, %v2235
    %v2338 = vpack.c.b16 %v2240, %v2238
    %v2339 = vpack.c.b16 %v2241, %v2239
    %v2340 = vpack.c.b16 %v2244, %v2242
    %v2341 = vpack.c.b16 %v2245, %v2243
    %v2342 = vpack.c.b16 %v2248, %v2246
    %v2343 = vpack.c.b16 %v2249, %v2247
    %v2344 = vpack.c.b16 %v2252, %v2250
    %v2345 = vpack.c.b16 %v2253, %v2251
    %v2346 = vpack.c.b16 %v2256, %v2254
    %v2347 = vpack.c.b16 %v2257, %v2255
    %v2348 = vpack.c.b16 %v2260, %v2258
    %v2349 = vpack.c.b16 %v2261, %v2259
    %v2350 = vpack.c.b16 %v2264, %v2262
    %v2351 = vpack.c.b16 %v2265, %v2263
    %v2352 = vpack.c.b16 %v2268, %v2266
    %v2353 = vpack.c.b16 %v2269, %v2267
    %v2354 = vpack.c.b16 %v2272, %v2270
    %v2355 = vpack.c.b16 %v2273, %v2271
    %v2356 = vpack.c.b16 %v2276, %v2274
    %v2357 = vpack.c.b16 %v2277, %v2275
    %v2358 = vpack.c.b16 %v2280, %v2278
    %v2359 = vpack.c.b16 %v2281, %v2279
    %v2360 = vpack.c.b16 %v2284, %v2282
    %v2361 = vpack.c.b16 %v2285, %v2283
    %v2362 = vpack.c.b16 %v2288, %v2286
    %v2363 = vpack.c.b16 %v2289, %v2287
    %v2364 = vpack.c.b16 %v2292, %v2290
    %v2365 = vpack.c.b16 %v2293, %v2291
    %v2366 = vpack.c.b16 %v2296, %v2294
    %v2367 = vpack.c.b16 %v2297, %v2295
    %v2368 = vpack.c.b16 %v2300, %v2298
    %v2369 = vpack.c.b16 %v2301, %v2299
    %v2370 = vpack.c.b16 %v2304, %v2302
    %v2371 = vpack.c.b16 %v2305, %v2303
    %v2372 = vpack.c.b16 %v2308, %v2306
    %v2373 = vpack.c.b16 %v2309, %v2307
    %2438 = vmatprep.subr.bf16.mxu0 %v2311
    %2439 = vmatpush1.bf16.msra.mxu0 %v2310
    %2440 = vmatprep.subr.bf16.mxu0 %v2313
    %2441 = vmatpush1.bf16.msra.mxu0 %v2312
    %2442 = vmatprep.subr.bf16.mxu0 %v2315
    %2443 = vmatpush1.bf16.msra.mxu0 %v2314
    %2444 = vmatprep.subr.bf16.mxu0 %v2317
    %2445 = vmatpush1.bf16.msra.mxu0 %v2316
    %2446 = vmatprep.subr.bf16.mxu0 %v2319
    %2447 = vmatpush1.bf16.msra.mxu0 %v2318
    %2448 = vmatprep.subr.bf16.mxu0 %v2321
    %2449 = vmatpush1.bf16.msra.mxu0 %v2320
    %2450 = vmatprep.subr.bf16.mxu0 %v2323
    %2451 = vmatpush1.bf16.msra.mxu0 %v2322
    %2452 = vmatprep.subr.bf16.mxu0 %v2325
    %2453 = vmatpush1.bf16.msra.mxu0 %v2324
    %2454 = vmatprep.subr.bf16.mxu0 %v2327
    %2455 = vmatpush1.bf16.msra.mxu0 %v2326
    %2456 = vmatprep.subr.bf16.mxu0 %v2329
    %2457 = vmatpush1.bf16.msra.mxu0 %v2328
    %2458 = vmatprep.subr.bf16.mxu0 %v2331
    %2459 = vmatpush1.bf16.msra.mxu0 %v2330
    %2460 = vmatprep.subr.bf16.mxu0 %v2333
    %2461 = vmatpush1.bf16.msra.mxu0 %v2332
    %2462 = vmatprep.subr.bf16.mxu0 %v2335
    %2463 = vmatpush1.bf16.msra.mxu0 %v2334
    %2464 = vmatprep.subr.bf16.mxu0 %v2337
    %2465 = vmatpush1.bf16.msra.mxu0 %v2336
    %2466 = vmatprep.subr.bf16.mxu0 %v2339
    %2467 = vmatpush1.bf16.msra.mxu0 %v2338
    %2468 = vmatprep.subr.bf16.mxu0 %v2341
    %2469 = vmatpush1.bf16.msra.mxu0 %v2340
    %2470 = vmatprep.mubr.bf16.mxu0 %v2094
    %2471 = vmatmul.mubr.bf16.gmra.mrb[0].mxu0 %v2093
    %v2472 = vpop.f32.mrb[0].mxu0
    %v2473 = vadd.f32 %v2113, %v2472
    %v2474 = vpop.f32.mrb[0].mxu0
    %v2475 = vadd.f32 %v2117, %v2474
    %v2476 = vpop.f32.mrb[0].mxu0
    %v2477 = vadd.f32 %v2113, %v2476
    %v2478 = vpop.f32.mrb[0].mxu0
    %v2479 = vadd.f32 %v2117, %v2478
    %2480 = vdwg.mxu0
    %2481 = vmatprep.subr.bf16.mxu0 %v2343
    %2482 = vmatpush1.bf16.msra.mxu0 %v2342
    %2483 = vmatprep.subr.bf16.mxu0 %v2345
    %2484 = vmatpush1.bf16.msra.mxu0 %v2344
    %2485 = vmatprep.subr.bf16.mxu0 %v2347
    %2486 = vmatpush1.bf16.msra.mxu0 %v2346
    %2487 = vmatprep.subr.bf16.mxu0 %v2349
    %2488 = vmatpush1.bf16.msra.mxu0 %v2348
    %2489 = vmatprep.subr.bf16.mxu0 %v2351
    %2490 = vmatpush1.bf16.msra.mxu0 %v2350
    %2491 = vmatprep.subr.bf16.mxu0 %v2353
    %2492 = vmatpush1.bf16.msra.mxu0 %v2352
    %2493 = vmatprep.subr.bf16.mxu0 %v2355
    %2494 = vmatpush1.bf16.msra.mxu0 %v2354
    %2495 = vmatprep.subr.bf16.mxu0 %v2357
    %2496 = vmatpush1.bf16.msra.mxu0 %v2356
    %2497 = vmatprep.subr.bf16.mxu0 %v2359
    %2498 = vmatpush1.bf16.msra.mxu0 %v2358
    %2499 = vmatprep.subr.bf16.mxu0 %v2361
    %2500 = vmatpush1.bf16.msra.mxu0 %v2360
    %2501 = vmatprep.subr.bf16.mxu0 %v2363
    %2502 = vmatpush1.bf16.msra.mxu0 %v2362
    %2503 = vmatprep.subr.bf16.mxu0 %v2365
    %2504 = vmatpush1.bf16.msra.mxu0 %v2364
    %2505 = vmatprep.subr.bf16.mxu0 %v2367
    %2506 = vmatpush1.bf16.msra.mxu0 %v2366
    %2507 = vmatprep.subr.bf16.mxu0 %v2369
    %2508 = vmatpush1.bf16.msra.mxu0 %v2368
    %2509 = vmatprep.subr.bf16.mxu0 %v2371
    %2510 = vmatpush1.bf16.msra.mxu0 %v2370
    %2511 = vmatprep.subr.bf16.mxu0 %v2373
    %2512 = vmatpush1.bf16.msra.mxu0 %v2372
    %2513 = vmatprep.mubr.bf16.mxu0 %v2096
    %2514 = vmatmul.mubr.bf16.gmra.mrb[0].mxu0 %v2095
    %v2515 = vpop.f32.mrb[0].mxu0
    %v2516 = vadd.f32 %v2473, %v2515
    %v2517 = vpop.f32.mrb[0].mxu0
    %v2518 = vadd.f32 %v2475, %v2517
    %v2519 = vpop.f32.mrb[0].mxu0
    %v2520 = vadd.f32 %v2477, %v2519
    %v2521 = vpop.f32.mrb[0].mxu0
    %v2522 = vadd.f32 %v2479, %v2521
    %2523 = vdwg.mxu0
    %2524 = vst [vmem:[#allocation15] sm:$0xff] %v2516
    %2525 = vst [vmem:[#allocation15 + $0x8] sm:$0xff] %v2518
    %2526 = vst [vmem:[#allocation15 + $0x10] sm:$0xff] %v2520
    %2527 = vst [vmem:[#allocation15 + $0x18] sm:$0xff] %v2522
    // Predicated region
    $region82: #{tpu_custom_call.1} parent=1 // pred_check
      _
    $region83: #{tpu_custom_call.1} parent=1 // pred_check_branch
      %2529 = sbr.rel (0) target = $region85
    $region84: #{tpu_custom_call.1} parent=1 // pred_region
      %s2531 = ssub.s32 256, 256
      %2532 = vsyncadd [#allocation4], %s2531
      %s2533 = sshll.u32 [#allocation14], 4
      %s2534 = int_to_ptr.vmem [resolvable:$true] %s2533
      %2539 = dma.vmem_to_hbm [thread:$0]  %s2534, 256, %s13, [#allocation4], 128, 128, 8
    $region85: #{tpu_custom_call.1} parent=1 // pred_fallthru
      _
    // Predicated region
    $region86: #{tpu_custom_call.1} parent=1 // pred_check
      _
    $region87: #{tpu_custom_call.1} parent=1 // pred_check_branch
      %2541 = sbr.rel (0) target = $region89
    $region88: #{tpu_custom_call.1} parent=1 // pred_region
      %s2543 = ssub.s32 512, 512
      %2544 = vsyncadd [#allocation16], %s2543
      %s2545 = sshll.u32 [#allocation15], 4
      %s2546 = int_to_ptr.vmem [resolvable:$true] %s2545
      %2551 = dma.vmem_to_hbm [thread:$0]  %s2546, 512, %s14, [#allocation16], 256, 256, 16
    $region89: #{tpu_custom_call.1} parent=1 // pred_fallthru
      _
    // Predicated region
    $region90: #{tpu_custom_call.1} parent=1 // pred_check
      _
    $region91: #{tpu_custom_call.1} parent=1 // pred_check_branch
      %2553 = sbr.rel (0) target = $region93
    $region92: #{tpu_custom_call.1} parent=1 // pred_region
      %2554 = dma.done [#allocation4], 256
    $region93: #{tpu_custom_call.1} parent=1 // pred_fallthru
      _
    // Predicated region
    $region94: #{tpu_custom_call.1} parent=1 // pred_check
      _
    $region95: #{tpu_custom_call.1} parent=1 // pred_check_branch
      %2556 = sbr.rel (0) target = $region97
    $region96: #{tpu_custom_call.1} parent=1 // pred_region
      %2557 = dma.done [#allocation16], 512
    $region97: #{tpu_custom_call.1} parent=1 // pred_fallthru
      _
    %2558 = vsyncpa [#allocation3], 1
    %2559 = vsyncpa [#allocation6], 1
    %2560 = vsyncpa [#allocation9], 1
    %2561 = vsyncpa [#allocation12], 1
    %2562 = vsyncpa [#allocation4], 1
    %2563 = vsyncpa [#allocation16], 1

</llo_original>
